<compile_context>
chip_gen: v6e
topology: v6e:2x2x1
jax: 0.10.0
libtpu: 0.0.40
codegen_flags: <defaults>
</compile_context>

<pallas_src>
import functools

import jax
import jax.numpy as jnp
import numpy as np
from jax import lax
from jax.experimental import pallas as pl
from jax.experimental.pallas import tpu as pltpu


# ---------------------------------------------------------------------------
# Fused Pallas kernel: all scales + BN + ReLU + conv2 + max-pool + FC
# ---------------------------------------------------------------------------
def _fused_kernel(xi_ref, w1_ref, s1_ref, b1_ref, w2_ref, s2_ref, b2_ref,
                  fcw_ref, fcb_ref, o_ref, *, L, K):
    """One batch tile of the whole model.

    xi_ref : (NB, Lp, K*Cin)  conv1 im2col of the zero-padded input, Lp = L + K - 1
    w1_ref : (K*Cin, C)       merged 3-scale conv1 filter bank  (C = 3*Ch, lane-dense)
    w2_ref : (K, C, C)        merged block-diagonal conv2 filter bank
    s*/b*  : (1, C)           folded inference BatchNorm scale / bias
    fcw/fcb: (C, nclass) / (1, nclass)
    o_ref  : (NB, 1, nclass)
    """
    NB, Lp, KCin = xi_ref.shape
    C = w1_ref.shape[1]
    pad = (K - 1) // 2

    # ---- conv1 for all three scales: ONE im2col matmul over extended positions ----
    h = jnp.dot(xi_ref[...].reshape(NB * Lp, KCin), w1_ref[...],
                preferred_element_type=jnp.float32)
    h = jnp.maximum(h * s1_ref[...] + b1_ref[...], 0.0)           # folded BN_A + ReLU
    h = h.reshape(NB, Lp, C)

    # Zero the halo positions so conv2 sees exact 'same' zero padding — register resident,
    # no VMEM scratch / zero-fill / unaligned scratch stores.
    pos = lax.broadcasted_iota(jnp.int32, (NB, Lp, C), 1)
    h = jnp.where((pos >= pad) & (pos < pad + L), h, 0.0)

    # ---- conv2 (block-diagonal filter bank): K shifted-view matmuls, f32 accumulation ----
    acc = jnp.zeros((NB * L, C), jnp.float32)
    for k in range(K):                                            # static unroll (K = 7)
        acc = acc + jnp.dot(h[:, k:k + L, :].reshape(NB * L, C), w2_ref[k],
                            preferred_element_type=jnp.float32)
    y = jnp.maximum(acc * s2_ref[...] + b2_ref[...], 0.0)         # folded BN_B + ReLU

    # ---- global max pool over sequence; features are already lane-concatenated -> fused FC ----
    feat = jnp.max(y.reshape(NB, L, C), axis=1)                   # (NB, C)
    logits = jnp.dot(feat, fcw_ref[...],
                     preferred_element_type=jnp.float32) + fcb_ref[...]
    o_ref[...] = logits.reshape(NB, 1, logits.shape[-1])
    # layers.dropout_fc: identity in eval mode (inference semantics).


# ---------------------------------------------------------------------------
# One-time weight preparation (merge scales, fold BN)
# ---------------------------------------------------------------------------
def _fold_bn(bn, conv_bias, eps=1e-5):
    gamma, beta, mean, var = bn
    s = gamma / jnp.sqrt(var + eps)
    return s, beta - mean * s + conv_bias * s


def prepare_params(params, ksizes=(3, 5, 7), eps=1e-5):
    """Pad each scale to K=max(ksizes) (centered, preserves 'same' alignment), concatenate
    along output channels, make conv2 block-diagonal, and fold BN(+conv bias) to scale/bias."""
    Kmax = max(ksizes)
    W1_0 = params['conv1_1'][0]
    Cin, Ch = W1_0.shape[1], W1_0.shape[2]
    C = len(ksizes) * Ch
    bn_pairs = [('bn1', 'bn2'), ('bn1', 'bn2'), ('bn2', 'bn2')]   # exactly as in forward()

    W1m = jnp.zeros((Kmax, Cin, C), jnp.float32)
    W2m = jnp.zeros((Kmax, C, C), jnp.float32)
    s1 = jnp.zeros((C,), jnp.float32)
    b1 = jnp.zeros((C,), jnp.float32)
    s2 = jnp.zeros((C,), jnp.float32)
    b2 = jnp.zeros((C,), jnp.float32)
    for idx, (K, (bnA, bnB)) in enumerate(zip(ksizes, bn_pairs)):
        W1, cb1 = params[f'conv{idx + 1}_1']      # (K, Cin, Ch) 'WIO'
        W2, cb2 = params[f'conv{idx + 1}_2']      # (K, Ch, Ch)
        off = (Kmax - K) // 2
        lo = idx * Ch
        W1m = W1m.at[off:off + K, :, lo:lo + Ch].set(W1)
        W2m = W2m.at[off:off + K, lo:lo + Ch, lo:lo + Ch].set(W2)
        sA, bA = _fold_bn(params[bnA], cb1, eps)
        sB, bB = _fold_bn(params[bnB], cb2, eps)
        s1 = s1.at[lo:lo + Ch].set(sA)
        b1 = b1.at[lo:lo + Ch].set(bA)
        s2 = s2.at[lo:lo + Ch].set(sB)
        b2 = b2.at[lo:lo + Ch].set(bB)

    return dict(
        w1=W1m.reshape(Kmax * Cin, C), w2=W2m,
        s1=s1.reshape(1, C), b1=b1.reshape(1, C),
        s2=s2.reshape(1, C), b2=b2.reshape(1, C),
        fcw=params['fc_w'], fcb=params['fc_b'])


# ---------------------------------------------------------------------------
# Forward wrapper (single pallas_call)
# ---------------------------------------------------------------------------
def multiscale_cnn_forward(merged, x_ncl):
    """x_ncl: (N, Cin, L) PyTorch NCL layout.  Returns logits (N, nclass)."""
    N, Cin, L = x_ncl.shape
    K = merged['w2'].shape[0]
    nclass = merged['fcw'].shape[1]
    pad = (K - 1) // 2
    Lp = L + 2 * pad                              # extended conv1 output length

    # NCL -> NLC, pad ONCE to the max halo, and build the conv1 im2col (fuses into one tiny
    # XLA fusion under jit); everything downstream is a single Pallas kernel.
    x = jnp.transpose(x_ncl, (0, 2, 1)).astype(jnp.float32)
    xp = jnp.pad(x, ((0, 0), (2 * pad, 2 * pad), (0, 0)))
    xi = jnp.concatenate([xp[:, k:k + Lp, :] for k in range(K)], axis=-1)   # (N, Lp, K*Cin)

    bn_blk = pl.cdiv(N, 2) if N > 1 else 1        # <=2 programs: feeds both v7x TensorCores
    grid_n = pl.cdiv(N, bn_blk)

    def _full(arr):
        nd = arr.ndim
        return pl.BlockSpec(arr.shape, lambda i, _nd=nd: (0,) * _nd)

    out = pl.pallas_call(
        functools.partial(_fused_kernel, L=L, K=K),
        out_shape=jax.ShapeDtypeStruct((N, 1, nclass), jnp.float32),
        grid=(grid_n,),
        in_specs=[
            pl.BlockSpec((bn_blk, Lp, xi.shape[2]), lambda i: (i, 0, 0)),
            _full(merged['w1']), _full(merged['s1']), _full(merged['b1']),
            _full(merged['w2']), _full(merged['s2']), _full(merged['b2']),
            _full(merged['fcw']), _full(merged['fcb']),
        ],
        out_specs=pl.BlockSpec((bn_blk, 1, nclass), lambda i: (i, 0, 0)),
        compiler_params=pltpu.CompilerParams(
            dimension_semantics=("parallel",)),
    )(xi, merged['w1'], merged['s1'], merged['b1'],
      merged['w2'], merged['s2'], merged['b2'],
      merged['fcw'], merged['fcb'])
    return out.reshape(N, nclass)


# ---------------------------------------------------------------------------
# Pure-JAX reference (for correctness check only)
# ---------------------------------------------------------------------------
def ref_forward(params, x_ncl, eps=1e-5):
    x = jnp.transpose(x_ncl, (0, 2, 1))

    def conv_bn_relu(h, W, cb, bn):
        K = W.shape[0]
        pad_l = (K - 1) // 2
        out = jax.lax.conv_general_dilated(
            h, W, window_strides=(1,), padding=[(pad_l, K - 1 - pad_l)],
            dimension_numbers=('NWC', 'WIO', 'NWC'))
        out = out + cb
        gamma, beta, mean, var = bn
        out = (out - mean) / jnp.sqrt(var + eps) * gamma + beta
        return jnp.maximum(out, 0.0)

    bn_pairs = [('bn1', 'bn2'), ('bn1', 'bn2'), ('bn2', 'bn2')]
    outs = []
    for i, (a, b) in enumerate(bn_pairs, start=1):
        W1, cb1 = params[f'conv{i}_1']
        W2, cb2 = params[f'conv{i}_2']
        h = conv_bn_relu(x, W1, cb1, params[a])
        h = conv_bn_relu(h, W2, cb2, params[b])
        outs.append(jnp.max(h, axis=1))
    feat = jnp.concatenate(outs, axis=1)
    return feat @ params['fc_w'] + params['fc_b']


# ---------------------------------------------------------------------------
# Main
# ---------------------------------------------------------------------------
if __name__ == "__main__":
    N, Cin, L = 2, 4, 16         # batch, one-hot nucleotide channels, sequence length
    Ch, nclass = 32, 4           # filters per conv, localization classes
    ksizes = (3, 5, 7)           # kernel size per scale

    keys = iter(jax.random.split(jax.random.PRNGKey(0), 32))
    params = {}
    for i, K in enumerate(ksizes, start=1):
        params[f'conv{i}_1'] = (
            0.1 * jax.random.normal(next(keys), (K, Cin, Ch), jnp.float32),
            0.1 * jax.random.normal(next(keys), (Ch,), jnp.float32))
        params[f'conv{i}_2'] = (
            0.1 * jax.random.normal(next(keys), (K, Ch, Ch), jnp.float32),
            0.1 * jax.random.normal(next(keys), (Ch,), jnp.float32))
    for name in ('bn1', 'bn2'):
        params[name] = (
            1.0 + 0.1 * jax.random.normal(next(keys), (Ch,), jnp.float32),          # gamma
            0.1 * jax.random.normal(next(keys), (Ch,), jnp.float32),                # beta
            0.1 * jax.random.normal(next(keys), (Ch,), jnp.float32),                # running mean
            1.0 + 0.1 * jnp.abs(jax.random.normal(next(keys), (Ch,), jnp.float32))) # running var
    params['fc_w'] = 0.1 * jax.random.normal(next(keys), (3 * Ch, nclass), jnp.float32)
    params['fc_b'] = 0.1 * jax.random.normal(next(keys), (1, nclass), jnp.float32)

    x = jax.random.normal(next(keys), (N, Cin, L), jnp.float32)   # PyTorch NCL layout

    merged = prepare_params(params, ksizes)                       # one-time weight prep
    fwd = jax.jit(multiscale_cnn_forward)
    out = jax.block_until_ready(fwd(merged, x))
    ref = jax.block_until_ready(ref_forward(params, x))

    assert out.shape == (N, nclass)
    np.testing.assert_allclose(np.asarray(out), np.asarray(ref), rtol=1e-4, atol=1e-4)
    print("KERNEL_OK")
</pallas_src>

<mosaic_0001>
module attributes {stable_mosaic.version = 11 : i64} {
  func.func @_fused_kernel(%arg0: i32, %arg1: memref<1x22x28xf32, #tpu.memory_space<vmem>>, %arg2: memref<28x96xf32, #tpu.memory_space<vmem>>, %arg3: memref<1x96xf32, #tpu.memory_space<vmem>>, %arg4: memref<1x96xf32, #tpu.memory_space<vmem>>, %arg5: memref<7x96x96xf32, #tpu.memory_space<vmem>>, %arg6: memref<1x96xf32, #tpu.memory_space<vmem>>, %arg7: memref<1x96xf32, #tpu.memory_space<vmem>>, %arg8: memref<96x4xf32, #tpu.memory_space<vmem>>, %arg9: memref<1x4xf32, #tpu.memory_space<vmem>>, %arg10: memref<1x1x4xf32, #tpu.memory_space<vmem>>) attributes {dimension_semantics = [#tpu.dimension_semantics<parallel>], iteration_bounds = array<i64: 2>, scalar_prefetch = 0 : i64, scratch_operands = 0 : i64, tpu.core_type = #tpu.core_type<tc>, window_params = [{transform_indices = @transform_0, window_bounds = array<i64: 1, 22, 28>}, {pipeline_mode = #tpu.pipeline_mode<synchronous>, transform_indices = @transform_1, window_bounds = array<i64: 28, 96>}, {pipeline_mode = #tpu.pipeline_mode<synchronous>, transform_indices = @transform_2, window_bounds = array<i64: 1, 96>}, {pipeline_mode = #tpu.pipeline_mode<synchronous>, transform_indices = @transform_3, window_bounds = array<i64: 1, 96>}, {pipeline_mode = #tpu.pipeline_mode<synchronous>, transform_indices = @transform_4, window_bounds = array<i64: 7, 96, 96>}, {pipeline_mode = #tpu.pipeline_mode<synchronous>, transform_indices = @transform_5, window_bounds = array<i64: 1, 96>}, {pipeline_mode = #tpu.pipeline_mode<synchronous>, transform_indices = @transform_6, window_bounds = array<i64: 1, 96>}, {pipeline_mode = #tpu.pipeline_mode<synchronous>, transform_indices = @transform_7, window_bounds = array<i64: 96, 4>}, {pipeline_mode = #tpu.pipeline_mode<synchronous>, transform_indices = @transform_8, window_bounds = array<i64: 1, 4>}, {transform_indices = @transform_9, window_bounds = array<i64: 1, 1, 4>}]} {
    %c0 = arith.constant 0 : index
    %c0_0 = arith.constant 0 : index
    %c0_1 = arith.constant 0 : index
    %0 = vector.load %arg1[%c0, %c0_0, %c0_1] : memref<1x22x28xf32, #tpu.memory_space<vmem>>, vector<1x22x28xf32>
    %1 = vector.shape_cast %0 : vector<1x22x28xf32> to vector<22x28xf32>
    %c0_2 = arith.constant 0 : index
    %c0_3 = arith.constant 0 : index
    %2 = vector.load %arg2[%c0_2, %c0_3] : memref<28x96xf32, #tpu.memory_space<vmem>>, vector<28x96xf32>
    %cst = arith.constant dense<0.000000e+00> : vector<22x96xf32>
    %3 = tpu.matmul %1, %2, %cst {dimension_numbers = #tpu.dot_dimension_numbers<[1], [0], [0], [1], [0, 0, 1, 1], [], []>} : vector<22x28xf32>, vector<28x96xf32>, vector<22x96xf32> -> vector<22x96xf32>
    %c0_4 = arith.constant 0 : index
    %c0_5 = arith.constant 0 : index
    %4 = vector.load %arg3[%c0_4, %c0_5] : memref<1x96xf32, #tpu.memory_space<vmem>>, vector<1x96xf32>
    %5 = vector.broadcast %4 : vector<1x96xf32> to vector<22x96xf32>
    %6 = arith.mulf %3, %5 : vector<22x96xf32>
    %c0_6 = arith.constant 0 : index
    %c0_7 = arith.constant 0 : index
    %7 = vector.load %arg4[%c0_6, %c0_7] : memref<1x96xf32, #tpu.memory_space<vmem>>, vector<1x96xf32>
    %8 = vector.broadcast %7 : vector<1x96xf32> to vector<22x96xf32>
    %9 = arith.addf %6, %8 : vector<22x96xf32>
    %cst_8 = arith.constant 0.000000e+00 : f32
    %10 = vector.broadcast %cst_8 : f32 to vector<22x96xf32>
    %11 = arith.maximumf %9, %10 : vector<22x96xf32>
    %12 = vector.shape_cast %11 : vector<22x96xf32> to vector<1x22x96xf32>
    %13 = tpu.iota {dimensions = array<i32: 1>} : vector<1x22x96xi32>
    %c3_i32 = arith.constant 3 : i32
    %14 = vector.broadcast %c3_i32 : i32 to vector<1x22x96xi32>
    %15 = arith.cmpi sge, %13, %14 : vector<1x22x96xi32>
    %c19_i32 = arith.constant 19 : i32
    %16 = vector.broadcast %c19_i32 : i32 to vector<1x22x96xi32>
    %17 = arith.cmpi slt, %13, %16 : vector<1x22x96xi32>
    %18 = arith.andi %15, %17 : vector<1x22x96xi1>
    %cst_9 = arith.constant 0.000000e+00 : f32
    %19 = vector.broadcast %cst_9 : f32 to vector<1x22x96xf32>
    %20 = arith.select %18, %12, %19 : vector<1x22x96xi1>, vector<1x22x96xf32>
    %cst_10 = arith.constant 0.000000e+00 : f32
    %21 = vector.broadcast %cst_10 : f32 to vector<16x96xf32>
    %22 = vector.extract_strided_slice %20 {offsets = [0, 0, 0], sizes = [1, 16, 96], strides = [1, 1, 1]} : vector<1x22x96xf32> to vector<1x16x96xf32>
    %23 = vector.shape_cast %22 : vector<1x16x96xf32> to vector<16x96xf32>
    %c0_11 = arith.constant 0 : index
    %c0_12 = arith.constant 0 : index
    %c0_13 = arith.constant 0 : index
    %24 = vector.load %arg5[%c0_11, %c0_12, %c0_13] : memref<7x96x96xf32, #tpu.memory_space<vmem>>, vector<1x96x96xf32>
    %25 = vector.shape_cast %24 : vector<1x96x96xf32> to vector<96x96xf32>
    %cst_14 = arith.constant dense<0.000000e+00> : vector<16x96xf32>
    %26 = tpu.matmul %23, %25, %cst_14 {dimension_numbers = #tpu.dot_dimension_numbers<[1], [0], [0], [1], [0, 0, 1, 1], [], []>} : vector<16x96xf32>, vector<96x96xf32>, vector<16x96xf32> -> vector<16x96xf32>
    %27 = arith.addf %21, %26 : vector<16x96xf32>
    %28 = vector.extract_strided_slice %20 {offsets = [0, 1, 0], sizes = [1, 16, 96], strides = [1, 1, 1]} : vector<1x22x96xf32> to vector<1x16x96xf32>
    %29 = vector.shape_cast %28 : vector<1x16x96xf32> to vector<16x96xf32>
    %c1 = arith.constant 1 : index
    %c0_15 = arith.constant 0 : index
    %c0_16 = arith.constant 0 : index
    %30 = vector.load %arg5[%c1, %c0_15, %c0_16] : memref<7x96x96xf32, #tpu.memory_space<vmem>>, vector<1x96x96xf32>
    %31 = vector.shape_cast %30 : vector<1x96x96xf32> to vector<96x96xf32>
    %cst_17 = arith.constant dense<0.000000e+00> : vector<16x96xf32>
    %32 = tpu.matmul %29, %31, %cst_17 {dimension_numbers = #tpu.dot_dimension_numbers<[1], [0], [0], [1], [0, 0, 1, 1], [], []>} : vector<16x96xf32>, vector<96x96xf32>, vector<16x96xf32> -> vector<16x96xf32>
    %33 = arith.addf %27, %32 : vector<16x96xf32>
    %34 = vector.extract_strided_slice %20 {offsets = [0, 2, 0], sizes = [1, 16, 96], strides = [1, 1, 1]} : vector<1x22x96xf32> to vector<1x16x96xf32>
    %35 = vector.shape_cast %34 : vector<1x16x96xf32> to vector<16x96xf32>
    %c2 = arith.constant 2 : index
    %c0_18 = arith.constant 0 : index
    %c0_19 = arith.constant 0 : index
    %36 = vector.load %arg5[%c2, %c0_18, %c0_19] : memref<7x96x96xf32, #tpu.memory_space<vmem>>, vector<1x96x96xf32>
    %37 = vector.shape_cast %36 : vector<1x96x96xf32> to vector<96x96xf32>
    %cst_20 = arith.constant dense<0.000000e+00> : vector<16x96xf32>
    %38 = tpu.matmul %35, %37, %cst_20 {dimension_numbers = #tpu.dot_dimension_numbers<[1], [0], [0], [1], [0, 0, 1, 1], [], []>} : vector<16x96xf32>, vector<96x96xf32>, vector<16x96xf32> -> vector<16x96xf32>
    %39 = arith.addf %33, %38 : vector<16x96xf32>
    %40 = vector.extract_strided_slice %20 {offsets = [0, 3, 0], sizes = [1, 16, 96], strides = [1, 1, 1]} : vector<1x22x96xf32> to vector<1x16x96xf32>
    %41 = vector.shape_cast %40 : vector<1x16x96xf32> to vector<16x96xf32>
    %c3 = arith.constant 3 : index
    %c0_21 = arith.constant 0 : index
    %c0_22 = arith.constant 0 : index
    %42 = vector.load %arg5[%c3, %c0_21, %c0_22] : memref<7x96x96xf32, #tpu.memory_space<vmem>>, vector<1x96x96xf32>
    %43 = vector.shape_cast %42 : vector<1x96x96xf32> to vector<96x96xf32>
    %cst_23 = arith.constant dense<0.000000e+00> : vector<16x96xf32>
    %44 = tpu.matmul %41, %43, %cst_23 {dimension_numbers = #tpu.dot_dimension_numbers<[1], [0], [0], [1], [0, 0, 1, 1], [], []>} : vector<16x96xf32>, vector<96x96xf32>, vector<16x96xf32> -> vector<16x96xf32>
    %45 = arith.addf %39, %44 : vector<16x96xf32>
    %46 = vector.extract_strided_slice %20 {offsets = [0, 4, 0], sizes = [1, 16, 96], strides = [1, 1, 1]} : vector<1x22x96xf32> to vector<1x16x96xf32>
    %47 = vector.shape_cast %46 : vector<1x16x96xf32> to vector<16x96xf32>
    %c4 = arith.constant 4 : index
    %c0_24 = arith.constant 0 : index
    %c0_25 = arith.constant 0 : index
    %48 = vector.load %arg5[%c4, %c0_24, %c0_25] : memref<7x96x96xf32, #tpu.memory_space<vmem>>, vector<1x96x96xf32>
    %49 = vector.shape_cast %48 : vector<1x96x96xf32> to vector<96x96xf32>
    %cst_26 = arith.constant dense<0.000000e+00> : vector<16x96xf32>
    %50 = tpu.matmul %47, %49, %cst_26 {dimension_numbers = #tpu.dot_dimension_numbers<[1], [0], [0], [1], [0, 0, 1, 1], [], []>} : vector<16x96xf32>, vector<96x96xf32>, vector<16x96xf32> -> vector<16x96xf32>
    %51 = arith.addf %45, %50 : vector<16x96xf32>
    %52 = vector.extract_strided_slice %20 {offsets = [0, 5, 0], sizes = [1, 16, 96], strides = [1, 1, 1]} : vector<1x22x96xf32> to vector<1x16x96xf32>
    %53 = vector.shape_cast %52 : vector<1x16x96xf32> to vector<16x96xf32>
    %c5 = arith.constant 5 : index
    %c0_27 = arith.constant 0 : index
    %c0_28 = arith.constant 0 : index
    %54 = vector.load %arg5[%c5, %c0_27, %c0_28] : memref<7x96x96xf32, #tpu.memory_space<vmem>>, vector<1x96x96xf32>
    %55 = vector.shape_cast %54 : vector<1x96x96xf32> to vector<96x96xf32>
    %cst_29 = arith.constant dense<0.000000e+00> : vector<16x96xf32>
    %56 = tpu.matmul %53, %55, %cst_29 {dimension_numbers = #tpu.dot_dimension_numbers<[1], [0], [0], [1], [0, 0, 1, 1], [], []>} : vector<16x96xf32>, vector<96x96xf32>, vector<16x96xf32> -> vector<16x96xf32>
    %57 = arith.addf %51, %56 : vector<16x96xf32>
    %58 = vector.extract_strided_slice %20 {offsets = [0, 6, 0], sizes = [1, 16, 96], strides = [1, 1, 1]} : vector<1x22x96xf32> to vector<1x16x96xf32>
    %59 = vector.shape_cast %58 : vector<1x16x96xf32> to vector<16x96xf32>
    %c6 = arith.constant 6 : index
    %c0_30 = arith.constant 0 : index
    %c0_31 = arith.constant 0 : index
    %60 = vector.load %arg5[%c6, %c0_30, %c0_31] : memref<7x96x96xf32, #tpu.memory_space<vmem>>, vector<1x96x96xf32>
    %61 = vector.shape_cast %60 : vector<1x96x96xf32> to vector<96x96xf32>
    %cst_32 = arith.constant dense<0.000000e+00> : vector<16x96xf32>
    %62 = tpu.matmul %59, %61, %cst_32 {dimension_numbers = #tpu.dot_dimension_numbers<[1], [0], [0], [1], [0, 0, 1, 1], [], []>} : vector<16x96xf32>, vector<96x96xf32>, vector<16x96xf32> -> vector<16x96xf32>
    %63 = arith.addf %57, %62 : vector<16x96xf32>
    %c0_33 = arith.constant 0 : index
    %c0_34 = arith.constant 0 : index
    %64 = vector.load %arg6[%c0_33, %c0_34] : memref<1x96xf32, #tpu.memory_space<vmem>>, vector<1x96xf32>
    %65 = vector.broadcast %64 : vector<1x96xf32> to vector<16x96xf32>
    %66 = arith.mulf %63, %65 : vector<16x96xf32>
    %c0_35 = arith.constant 0 : index
    %c0_36 = arith.constant 0 : index
    %67 = vector.load %arg7[%c0_35, %c0_36] : memref<1x96xf32, #tpu.memory_space<vmem>>, vector<1x96xf32>
    %68 = vector.broadcast %67 : vector<1x96xf32> to vector<16x96xf32>
    %69 = arith.addf %66, %68 : vector<16x96xf32>
    %cst_37 = arith.constant 0.000000e+00 : f32
    %70 = vector.broadcast %cst_37 : f32 to vector<16x96xf32>
    %71 = arith.maximumf %69, %70 : vector<16x96xf32>
    %72 = vector.shape_cast %71 : vector<16x96xf32> to vector<1x16x96xf32>
    %cst_38 = arith.constant dense<0xFF800000> : vector<1x96xf32>
    %73 = vector.multi_reduction <maximumf>, %72, %cst_38 [1] : vector<1x16x96xf32> to vector<1x96xf32>
    %c0_39 = arith.constant 0 : index
    %c0_40 = arith.constant 0 : index
    %74 = vector.load %arg8[%c0_39, %c0_40] : memref<96x4xf32, #tpu.memory_space<vmem>>, vector<96x4xf32>
    %cst_41 = arith.constant dense<0.000000e+00> : vector<1x4xf32>
    %75 = tpu.matmul %73, %74, %cst_41 {dimension_numbers = #tpu.dot_dimension_numbers<[1], [0], [0], [1], [0, 0, 1, 1], [], []>} : vector<1x96xf32>, vector<96x4xf32>, vector<1x4xf32> -> vector<1x4xf32>
    %c0_42 = arith.constant 0 : index
    %c0_43 = arith.constant 0 : index
    %76 = vector.load %arg9[%c0_42, %c0_43] : memref<1x4xf32, #tpu.memory_space<vmem>>, vector<1x4xf32>
    %77 = arith.addf %75, %76 : vector<1x4xf32>
    %78 = vector.shape_cast %77 : vector<1x4xf32> to vector<1x1x4xf32>
    %c0_44 = arith.constant 0 : index
    %c0_45 = arith.constant 0 : index
    %c0_46 = arith.constant 0 : index
    %79 = vector.load %arg10[%c0_44, %c0_45, %c0_46] : memref<1x1x4xf32, #tpu.memory_space<vmem>>, vector<1x1x4xf32>
    tpu.vector_store %arg10[%c0_44, %c0_45, %c0_46], %78 {strides = array<i32>} : memref<1x1x4xf32, #tpu.memory_space<vmem>>, vector<1x1x4xf32>,
    return
  }
  func.func @transform_0(%arg0: i32) -> (i32, i32, i32) {
    %c0_i32 = arith.constant 0 : i32
    %c0_i32_0 = arith.constant 0 : i32
    %c0_i32_1 = arith.constant 0 : i32
    return %arg0, %c0_i32, %c0_i32_0 : i32, i32, i32
  }
  func.func @transform_1(%arg0: i32) -> (i32, i32) {
    %c0_i32 = arith.constant 0 : i32
    %c0_i32_0 = arith.constant 0 : i32
    %c0_i32_1 = arith.constant 0 : i32
    return %c0_i32, %c0_i32_0 : i32, i32
  }
  func.func @transform_2(%arg0: i32) -> (i32, i32) {
    %c0_i32 = arith.constant 0 : i32
    %c0_i32_0 = arith.constant 0 : i32
    %c0_i32_1 = arith.constant 0 : i32
    return %c0_i32, %c0_i32_0 : i32, i32
  }
  func.func @transform_3(%arg0: i32) -> (i32, i32) {
    %c0_i32 = arith.constant 0 : i32
    %c0_i32_0 = arith.constant 0 : i32
    %c0_i32_1 = arith.constant 0 : i32
    return %c0_i32, %c0_i32_0 : i32, i32
  }
  func.func @transform_4(%arg0: i32) -> (i32, i32, i32) {
    %c0_i32 = arith.constant 0 : i32
    %c0_i32_0 = arith.constant 0 : i32
    %c0_i32_1 = arith.constant 0 : i32
    %c0_i32_2 = arith.constant 0 : i32
    return %c0_i32, %c0_i32_0, %c0_i32_1 : i32, i32, i32
  }
  func.func @transform_5(%arg0: i32) -> (i32, i32) {
    %c0_i32 = arith.constant 0 : i32
    %c0_i32_0 = arith.constant 0 : i32
    %c0_i32_1 = arith.constant 0 : i32
    return %c0_i32, %c0_i32_0 : i32, i32
  }
  func.func @transform_6(%arg0: i32) -> (i32, i32) {
    %c0_i32 = arith.constant 0 : i32
    %c0_i32_0 = arith.constant 0 : i32
    %c0_i32_1 = arith.constant 0 : i32
    return %c0_i32, %c0_i32_0 : i32, i32
  }
  func.func @transform_7(%arg0: i32) -> (i32, i32) {
    %c0_i32 = arith.constant 0 : i32
    %c0_i32_0 = arith.constant 0 : i32
    %c0_i32_1 = arith.constant 0 : i32
    return %c0_i32, %c0_i32_0 : i32, i32
  }
  func.func @transform_8(%arg0: i32) -> (i32, i32) {
    %c0_i32 = arith.constant 0 : i32
    %c0_i32_0 = arith.constant 0 : i32
    %c0_i32_1 = arith.constant 0 : i32
    return %c0_i32, %c0_i32_0 : i32, i32
  }
  func.func @transform_9(%arg0: i32) -> (i32, i32, i32) {
    %c0_i32 = arith.constant 0 : i32
    %c0_i32_0 = arith.constant 0 : i32
    %c0_i32_1 = arith.constant 0 : i32
    return %arg0, %c0_i32, %c0_i32_0 : i32, i32, i32
  }
}

</mosaic_0001>

<llo_original>
// kernel: multiscale_cnn_forward.1
$region0: #{multiscale_cnn_forward.1}
  #allocation0 [shape = 'u32[]', space=smem, size = 0x4, offset = 0x4, fixed_abs, tag = 'smem constant byte address 0x4 - core index']
  #allocation1 [shape = 'u32[144,128]{1,0:T(1,128)}', space=vmem, size = 0x12000, scoped, tag = 'internal scratch']
  %s0 = inlined_call_operand.vmem [shape: f32[2,22,28], index: 0, kind: input, shape index: {}]
  %s1 = inlined_call_operand.vmem [shape: f32[28,96], index: 1, kind: input, shape index: {}]
  %s2 = inlined_call_operand.vmem [shape: f32[1,96], index: 2, kind: input, shape index: {}]
  %s3 = inlined_call_operand.vmem [shape: f32[1,96], index: 3, kind: input, shape index: {}]
  %s4 = inlined_call_operand.vmem [shape: f32[7,96,96], index: 4, kind: input, shape index: {}]
  %s5 = inlined_call_operand.vmem [shape: f32[1,96], index: 5, kind: input, shape index: {}]
  %s6 = inlined_call_operand.vmem [shape: f32[1,96], index: 6, kind: input, shape index: {}]
  %s7 = inlined_call_operand.vmem [shape: f32[96,4], index: 7, kind: input, shape index: {}]
  %s8 = inlined_call_operand.vmem [shape: f32[1,4], index: 8, kind: input, shape index: {}]
  %s9 = inlined_call_operand.hbm [shape: f32[2,1,4], index: 9, kind: output, shape index: {}]
  %s10 = sld [smem:[#allocation0]]
  $region69: #{multiscale_cnn_forward.1} parent=0
    _
  %s12 = ssub.s32 1, %s10
  %s13 = scalar_select 0, %s12, %s10
  $region1: #{multiscale_cnn_forward.1} parent=0
    #allocation2 [shape = 'u8[1024]{0}', space=vmem, size = 0x400, scoped, tag = 'output window, operand 0']
    #allocation3 [shape = 's32[2]{0}', space=sflag, size = 0x8, scoped, tag = 'scoped memory for multiscale_cnn_forward.1']
    %14 = vsyncpa [#allocation3], 0
    %s15 = scalar_lea.sflag [#allocation3], 1
    %16 = vsyncpa %s15, 0
    loop: start=0, step=1, limit=4
    $region2: #{multiscale_cnn_forward.1} parent=1 // loop_pre_header
      _
    $region3: #{multiscale_cnn_forward.1} parent=1 // loop_header
      %s18 = sphi 0, %s22
      %p19 = scmp.ge.s32.totalorder %s18, 4
      %s28 = sphi 0, %s30
      %s31 = sphi 0, %s28
      %s32 = sphi 0, %s31
      %s48 = sphi 0, %s32
      %s52 = sphi 0, %s52
      %s54 = sphi 0, %s52
      %s55 = sphi 0, %s54
      %s69 = sphi 0, %s55
      %s73 = sphi 0, %s73
      %s75 = sphi 0, %s73
      %s76 = sphi 0, %s75
      %s90 = sphi 0, %s76
      %s94 = sphi 0, %s94
      %s96 = sphi 0, %s94
      %s97 = sphi 0, %s96
      %s111 = sphi 0, %s97
      %s115 = sphi 0, %s115
      %s117 = sphi 0, %s115
      %s118 = sphi 0, %s117
      %s132 = sphi 0, %s118
      %s136 = sphi 0, %s136
      %s138 = sphi 0, %s136
      %s139 = sphi 0, %s138
      %s153 = sphi 0, %s139
      %s157 = sphi 0, %s157
      %s159 = sphi 0, %s157
      %s160 = sphi 0, %s159
      %s174 = sphi 0, %s160
      %s178 = sphi 0, %s178
      %s180 = sphi 0, %s178
      %s181 = sphi 0, %s180
      %s195 = sphi 0, %s181
      %s199 = sphi 0, %s199
      %s201 = sphi 0, %s199
      %s202 = sphi 0, %s201
      %s216 = sphi 0, %s202
      %s222 = sphi 0, %s224
      %s225 = sphi 0, %s222
      %s226 = sphi 0, %s225
      %s242 = sphi 0, %s226
    $region4: #{multiscale_cnn_forward.1} parent=1 // loop_header_branch
      %21 = sbr.rel (%p19) target = $region8
    $region5: #{multiscale_cnn_forward.1} parent=1 // loop_body
      %s23 = ssub.s32 %s18, 1
      %s24 = ssub.s32 %s18, 2
      %s25 = sadd.s32 %s18, 1
      %s26 = ssub.s32 %s18, %s25
      %p27 = scmp.eq.s32.totalorder %s26, 0
      %s29 = sadd.s32 %s28, 1
      %s30 = scalar_select %p27, %s28, %s29
      %p33 = pneg %p27
      %p34 = scmp.eq.s32.totalorder %s18, 1
      %p35 = por %p33, %p34
      %p36 = scmp.ne.s32.totalorder %s28, %s31
      %p37 = scmp.eq.s32.totalorder %s18, 0
      %p38 = por %p36, %p37
      %p39 = scmp.ne.s32.totalorder %s28, %s31
      %p40 = scmp.eq.s32.totalorder %s23, 1
      %p41 = por %p39, %p40
      %p42 = scmp.ne.s32.totalorder %s31, %s32
      %p43 = scmp.eq.s32.totalorder %s23, 0
      %p44 = por %p42, %p43
      %p45 = scmp.ne.s32.totalorder %s31, %s32
      %p46 = scmp.eq.s32.totalorder %s24, 1
      %p47 = por %p45, %p46
      %p49 = scmp.ne.s32.totalorder %s32, %s48
      %p50 = scmp.eq.s32.totalorder %s24, 0
      %p51 = por %p49, %p50
      %s53 = sadd.s32 %s52, 1
      %p56 = scmp.eq.s32.totalorder %s18, 1
      %p57 = scmp.ne.s32.totalorder %s52, %s54
      %p58 = scmp.eq.s32.totalorder %s18, 0
      %p59 = por %p57, %p58
      %p60 = scmp.ne.s32.totalorder %s52, %s54
      %p61 = scmp.eq.s32.totalorder %s23, 1
      %p62 = por %p60, %p61
      %p63 = scmp.ne.s32.totalorder %s54, %s55
      %p64 = scmp.eq.s32.totalorder %s23, 0
      %p65 = por %p63, %p64
      %p66 = scmp.ne.s32.totalorder %s54, %s55
      %p67 = scmp.eq.s32.totalorder %s24, 1
      %p68 = por %p66, %p67
      %p70 = scmp.ne.s32.totalorder %s55, %s69
      %p71 = scmp.eq.s32.totalorder %s24, 0
      %p72 = por %p70, %p71
      %s74 = sadd.s32 %s73, 1
      %p77 = scmp.eq.s32.totalorder %s18, 1
      %p78 = scmp.ne.s32.totalorder %s73, %s75
      %p79 = scmp.eq.s32.totalorder %s18, 0
      %p80 = por %p78, %p79
      %p81 = scmp.ne.s32.totalorder %s73, %s75
      %p82 = scmp.eq.s32.totalorder %s23, 1
      %p83 = por %p81, %p82
      %p84 = scmp.ne.s32.totalorder %s75, %s76
      %p85 = scmp.eq.s32.totalorder %s23, 0
      %p86 = por %p84, %p85
      %p87 = scmp.ne.s32.totalorder %s75, %s76
      %p88 = scmp.eq.s32.totalorder %s24, 1
      %p89 = por %p87, %p88
      %p91 = scmp.ne.s32.totalorder %s76, %s90
      %p92 = scmp.eq.s32.totalorder %s24, 0
      %p93 = por %p91, %p92
      %s95 = sadd.s32 %s94, 1
      %p98 = scmp.eq.s32.totalorder %s18, 1
      %p99 = scmp.ne.s32.totalorder %s94, %s96
      %p100 = scmp.eq.s32.totalorder %s18, 0
      %p101 = por %p99, %p100
      %p102 = scmp.ne.s32.totalorder %s94, %s96
      %p103 = scmp.eq.s32.totalorder %s23, 1
      %p104 = por %p102, %p103
      %p105 = scmp.ne.s32.totalorder %s96, %s97
      %p106 = scmp.eq.s32.totalorder %s23, 0
      %p107 = por %p105, %p106
      %p108 = scmp.ne.s32.totalorder %s96, %s97
      %p109 = scmp.eq.s32.totalorder %s24, 1
      %p110 = por %p108, %p109
      %p112 = scmp.ne.s32.totalorder %s97, %s111
      %p113 = scmp.eq.s32.totalorder %s24, 0
      %p114 = por %p112, %p113
      %s116 = sadd.s32 %s115, 1
      %p119 = scmp.eq.s32.totalorder %s18, 1
      %p120 = scmp.ne.s32.totalorder %s115, %s117
      %p121 = scmp.eq.s32.totalorder %s18, 0
      %p122 = por %p120, %p121
      %p123 = scmp.ne.s32.totalorder %s115, %s117
      %p124 = scmp.eq.s32.totalorder %s23, 1
      %p125 = por %p123, %p124
      %p126 = scmp.ne.s32.totalorder %s117, %s118
      %p127 = scmp.eq.s32.totalorder %s23, 0
      %p128 = por %p126, %p127
      %p129 = scmp.ne.s32.totalorder %s117, %s118
      %p130 = scmp.eq.s32.totalorder %s24, 1
      %p131 = por %p129, %p130
      %p133 = scmp.ne.s32.totalorder %s118, %s132
      %p134 = scmp.eq.s32.totalorder %s24, 0
      %p135 = por %p133, %p134
      %s137 = sadd.s32 %s136, 1
      %p140 = scmp.eq.s32.totalorder %s18, 1
      %p141 = scmp.ne.s32.totalorder %s136, %s138
      %p142 = scmp.eq.s32.totalorder %s18, 0
      %p143 = por %p141, %p142
      %p144 = scmp.ne.s32.totalorder %s136, %s138
      %p145 = scmp.eq.s32.totalorder %s23, 1
      %p146 = por %p144, %p145
      %p147 = scmp.ne.s32.totalorder %s138, %s139
      %p148 = scmp.eq.s32.totalorder %s23, 0
      %p149 = por %p147, %p148
      %p150 = scmp.ne.s32.totalorder %s138, %s139
      %p151 = scmp.eq.s32.totalorder %s24, 1
      %p152 = por %p150, %p151
      %p154 = scmp.ne.s32.totalorder %s139, %s153
      %p155 = scmp.eq.s32.totalorder %s24, 0
      %p156 = por %p154, %p155
      %s158 = sadd.s32 %s157, 1
      %p161 = scmp.eq.s32.totalorder %s18, 1
      %p162 = scmp.ne.s32.totalorder %s157, %s159
      %p163 = scmp.eq.s32.totalorder %s18, 0
      %p164 = por %p162, %p163
      %p165 = scmp.ne.s32.totalorder %s157, %s159
      %p166 = scmp.eq.s32.totalorder %s23, 1
      %p167 = por %p165, %p166
      %p168 = scmp.ne.s32.totalorder %s159, %s160
      %p169 = scmp.eq.s32.totalorder %s23, 0
      %p170 = por %p168, %p169
      %p171 = scmp.ne.s32.totalorder %s159, %s160
      %p172 = scmp.eq.s32.totalorder %s24, 1
      %p173 = por %p171, %p172
      %p175 = scmp.ne.s32.totalorder %s160, %s174
      %p176 = scmp.eq.s32.totalorder %s24, 0
      %p177 = por %p175, %p176
      %s179 = sadd.s32 %s178, 1
      %p182 = scmp.eq.s32.totalorder %s18, 1
      %p183 = scmp.ne.s32.totalorder %s178, %s180
      %p184 = scmp.eq.s32.totalorder %s18, 0
      %p185 = por %p183, %p184
      %p186 = scmp.ne.s32.totalorder %s178, %s180
      %p187 = scmp.eq.s32.totalorder %s23, 1
      %p188 = por %p186, %p187
      %p189 = scmp.ne.s32.totalorder %s180, %s181
      %p190 = scmp.eq.s32.totalorder %s23, 0
      %p191 = por %p189, %p190
      %p192 = scmp.ne.s32.totalorder %s180, %s181
      %p193 = scmp.eq.s32.totalorder %s24, 1
      %p194 = por %p192, %p193
      %p196 = scmp.ne.s32.totalorder %s181, %s195
      %p197 = scmp.eq.s32.totalorder %s24, 0
      %p198 = por %p196, %p197
      %s200 = sadd.s32 %s199, 1
      %p203 = scmp.eq.s32.totalorder %s18, 1
      %p204 = scmp.ne.s32.totalorder %s199, %s201
      %p205 = scmp.eq.s32.totalorder %s18, 0
      %p206 = por %p204, %p205
      %p207 = scmp.ne.s32.totalorder %s199, %s201
      %p208 = scmp.eq.s32.totalorder %s23, 1
      %p209 = por %p207, %p208
      %p210 = scmp.ne.s32.totalorder %s201, %s202
      %p211 = scmp.eq.s32.totalorder %s23, 0
      %p212 = por %p210, %p211
      %p213 = scmp.ne.s32.totalorder %s201, %s202
      %p214 = scmp.eq.s32.totalorder %s24, 1
      %p215 = por %p213, %p214
      %p217 = scmp.ne.s32.totalorder %s202, %s216
      %p218 = scmp.eq.s32.totalorder %s24, 0
      %p219 = por %p217, %p218
      %s220 = ssub.s32 %s18, %s25
      %p221 = scmp.eq.s32.totalorder %s220, 0
      %s223 = sadd.s32 %s222, 1
      %s224 = scalar_select %p221, %s222, %s223
      %p227 = pneg %p221
      %p228 = scmp.eq.s32.totalorder %s18, 1
      %p229 = por %p227, %p228
      %p230 = scmp.ne.s32.totalorder %s222, %s225
      %p231 = scmp.eq.s32.totalorder %s18, 0
      %p232 = por %p230, %p231
      %p233 = scmp.ne.s32.totalorder %s222, %s225
      %p234 = scmp.eq.s32.totalorder %s23, 1
      %p235 = por %p233, %p234
      %p236 = scmp.ne.s32.totalorder %s225, %s226
      %p237 = scmp.eq.s32.totalorder %s23, 0
      %p238 = por %p236, %p237
      %p239 = scmp.ne.s32.totalorder %s225, %s226
      %p240 = scmp.eq.s32.totalorder %s24, 1
      %p241 = por %p239, %p240
      %p243 = scmp.ne.s32.totalorder %s226, %s242
      %p244 = scmp.eq.s32.totalorder %s24, 0
      %p245 = por %p243, %p244
      %p246 = scmp.le.s32.totalorder 1, %s18
      %p247 = scmp.lt.s32.totalorder %s18, 3
      %p248 = pnand %p246, %p247
      %p249 = pneg %p248
      // Predicated region
      $region9: #{multiscale_cnn_forward.1} parent=5 // pred_check
        _
      $region10: #{multiscale_cnn_forward.1} parent=5 // pred_check_branch
        %251 = sbr.rel (%p248) target = $region12
      $region11: #{multiscale_cnn_forward.1} parent=5 // pred_region
        %s252 = ssub.s32 %s18, 1
        // Predicated region
        $region13: #{multiscale_cnn_forward.1} parent=11 // pred_check
          %p253 = pneg %p65
        $region14: #{multiscale_cnn_forward.1} parent=11 // pred_check_branch
          %255 = sbr.rel (%p253) target = $region16
        $region15: #{multiscale_cnn_forward.1} parent=11 // pred_region
          _
        $region16: #{multiscale_cnn_forward.1} parent=11 // pred_fallthru
          _
        // Predicated region
        $region17: #{multiscale_cnn_forward.1} parent=11 // pred_check
          %p256 = pneg %p86
        $region18: #{multiscale_cnn_forward.1} parent=11 // pred_check_branch
          %258 = sbr.rel (%p256) target = $region20
        $region19: #{multiscale_cnn_forward.1} parent=11 // pred_region
          _
        $region20: #{multiscale_cnn_forward.1} parent=11 // pred_fallthru
          _
        // Predicated region
        $region21: #{multiscale_cnn_forward.1} parent=11 // pred_check
          %p259 = pneg %p107
        $region22: #{multiscale_cnn_forward.1} parent=11 // pred_check_branch
          %261 = sbr.rel (%p259) target = $region24
        $region23: #{multiscale_cnn_forward.1} parent=11 // pred_region
          _
        $region24: #{multiscale_cnn_forward.1} parent=11 // pred_fallthru
          _
        // Predicated region
        $region25: #{multiscale_cnn_forward.1} parent=11 // pred_check
          %p262 = pneg %p128
        $region26: #{multiscale_cnn_forward.1} parent=11 // pred_check_branch
          %264 = sbr.rel (%p262) target = $region28
        $region27: #{multiscale_cnn_forward.1} parent=11 // pred_region
          _
        $region28: #{multiscale_cnn_forward.1} parent=11 // pred_fallthru
          _
        // Predicated region
        $region29: #{multiscale_cnn_forward.1} parent=11 // pred_check
          %p265 = pneg %p149
        $region30: #{multiscale_cnn_forward.1} parent=11 // pred_check_branch
          %267 = sbr.rel (%p265) target = $region32
        $region31: #{multiscale_cnn_forward.1} parent=11 // pred_region
          _
        $region32: #{multiscale_cnn_forward.1} parent=11 // pred_fallthru
          _
        // Predicated region
        $region33: #{multiscale_cnn_forward.1} parent=11 // pred_check
          %p268 = pneg %p170
        $region34: #{multiscale_cnn_forward.1} parent=11 // pred_check_branch
          %270 = sbr.rel (%p268) target = $region36
        $region35: #{multiscale_cnn_forward.1} parent=11 // pred_region
          _
        $region36: #{multiscale_cnn_forward.1} parent=11 // pred_fallthru
          _
        // Predicated region
        $region37: #{multiscale_cnn_forward.1} parent=11 // pred_check
          %p271 = pneg %p191
        $region38: #{multiscale_cnn_forward.1} parent=11 // pred_check_branch
          %273 = sbr.rel (%p271) target = $region40
        $region39: #{multiscale_cnn_forward.1} parent=11 // pred_region
          _
        $region40: #{multiscale_cnn_forward.1} parent=11 // pred_fallthru
          _
        // Predicated region
        $region41: #{multiscale_cnn_forward.1} parent=11 // pred_check
          %p274 = pneg %p212
        $region42: #{multiscale_cnn_forward.1} parent=11 // pred_check_branch
          %276 = sbr.rel (%p274) target = $region44
        $region43: #{multiscale_cnn_forward.1} parent=11 // pred_region
          _
        $region44: #{multiscale_cnn_forward.1} parent=11 // pred_fallthru
          _
      $region12: #{multiscale_cnn_forward.1} parent=5 // pred_fallthru
        _
      %p277 = scmp.lt.s32.totalorder %s18, 2
      // Predicated region
      $region45: #{multiscale_cnn_forward.1} parent=5 // pred_check
        %p278 = pneg %p277
      $region46: #{multiscale_cnn_forward.1} parent=5 // pred_check_branch
        %280 = sbr.rel (%p278) target = $region48
      $region47: #{multiscale_cnn_forward.1} parent=5 // pred_region
        // Predicated region
        $region49: #{multiscale_cnn_forward.1} parent=47 // pred_check
          %p281 = pneg %p38
        $region50: #{multiscale_cnn_forward.1} parent=47 // pred_check_branch
          %283 = sbr.rel (%p281) target = $region52
        $region51: #{multiscale_cnn_forward.1} parent=47 // pred_region
          %p284 = scmp.lt.s32.totalorder %s18, 1
          %s285 = scalar_select %p284, %s18, 1
          %s286 = smul.addr %s285, 3
          %s287 = smul.addr %s286, 8
          %s288 = scalar_lea.vmem %s0, %s287
        $region52: #{multiscale_cnn_forward.1} parent=47 // pred_fallthru
          _
      $region48: #{multiscale_cnn_forward.1} parent=5 // pred_fallthru
        _
      %p289 = scmp.le.s32.totalorder 1, %s18
      %p290 = scmp.lt.s32.totalorder %s18, 3
      %p291 = pnand %p289, %p290
      %p292 = pneg %p291
      // Predicated region
      $region53: #{multiscale_cnn_forward.1} parent=5 // pred_check
        _
      $region54: #{multiscale_cnn_forward.1} parent=5 // pred_check_branch
        %294 = sbr.rel (%p291) target = $region56
      $region55: #{multiscale_cnn_forward.1} parent=5 // pred_region
        %s295 = ssub.s32 %s18, 1
        %p296 = scmp.lt.s32.totalorder %s23, 1
        %s297 = scalar_select %p296, %s23, 1
        %s298 = smul.addr %s297, 3
        %s299 = smul.addr %s298, 8
        %s300 = scalar_lea.vmem %s0, %s299
        %p301 = pneg %p44
        %p302 = pneg %p41
        %p303 = pneg %p65
        %p304 = pneg %p62
        %p305 = pneg %p86
        %p306 = pneg %p83
        %p307 = pneg %p107
        %p308 = pneg %p104
        %p309 = pneg %p128
        %p310 = pneg %p125
        %p311 = pneg %p149
        %p312 = pneg %p146
        %p313 = pneg %p170
        %p314 = pneg %p167
        %p315 = pneg %p191
        %p316 = pneg %p188
        %p317 = pneg %p212
        %p318 = pneg %p209
        %p319 = pneg %p238
        %p320 = pneg %p235
        %s321 = sand.u32 %s225, 1
        %s322 = scalar_lea.sflag [#allocation3], %s321
        %s323 = sand.u32 %s225, 1
        %s324 = scalar_lea.vmem [#allocation2], %s323
        %p325 = scmp.lt.s32.totalorder %s23, 1
        %s326 = scalar_select %p325, %s23, 1
        %s327 = smul.addr %s326, 3
        %s328 = smul.addr %s327, 8
        %s329 = scalar_lea.vmem %s0, %s328
        %v330 = vld [vmem:[%s329] sm:$0xff]
        %v331 = vld [vmem:[%s329 + $0x8] sm:$0xff]
        %v332 = vld [vmem:[%s329 + $0x10] sm:$0x3f]
        %v333 = vld [vmem:[%s1] sm:$0xff]
        %v334 = vld [vmem:[%s1 + $0x8] sm:$0xff]
        %v335 = vld [vmem:[%s1 + $0x10] sm:$0xff]
        %v336 = vld [vmem:[%s1 + $0x18] sm:$0xf]
        %vm337 = vcmask 228352
        %v339 = vsel %vm337, %v330, 0
        %v342 = vsel %vm337, %v331, 0
        %v345 = vsel %vm337, %v332, 0
        %vm347 = vcmask 1043456
        %v349 = vsel %vm347, %v336, 0
        %351 = vmatprep.subr.mxu0 0.0
        %352 = vmatpush1.msra.mxu0 0.0
        %353 = vmatprep.subr.mxu0 0.0
        %354 = vmatpush1.msra.mxu0 0.0
        %355 = vmatprep.subr.mxu0 0.0
        %356 = vmatpush1.msra.mxu0 0.0
        %357 = vmatprep.subr.mxu0 0.0
        %358 = vmatpush1.msra.mxu0 0.0
        %359 = vmatprep.subr.mxu0 0.0
        %360 = vmatpush1.msra.mxu0 0.0
        %361 = vmatprep.subr.mxu0 0.0
        %362 = vmatpush1.msra.mxu0 0.0
        %363 = vmatprep.subr.mxu0 0.0
        %364 = vmatpush1.msra.mxu0 0.0
        %365 = vmatprep.subr.mxu0 0.0
        %366 = vmatpush1.msra.mxu0 0.0
        %367 = vmatprep.subr.mxu0 0.0
        %368 = vmatpush1.msra.mxu0 0.0
        %369 = vmatprep.subr.mxu0 0.0
        %370 = vmatpush1.msra.mxu0 0.0
        %371 = vmatprep.subr.mxu0 0.0
        %372 = vmatpush1.msra.mxu0 0.0
        %373 = vmatprep.subr.mxu0 0.0
        %374 = vmatpush1.msra.mxu0 0.0
        %375 = vmatprep.subr.mxu0 0.0
        %376 = vmatpush1.msra.mxu0 %v349
        %377 = vmatprep.subr.mxu0 0.0
        %378 = vmatpush1.msra.mxu0 %v335
        %379 = vmatprep.subr.mxu0 0.0
        %380 = vmatpush1.msra.mxu0 %v334
        %381 = vmatprep.subr.mxu0 0.0
        %382 = vmatpush1.msra.mxu0 %v333
        %383 = vmatprep.subr.mxu0 0.0
        %384 = vmatpush2.msra.mxu0 0.0
        %385 = vmatprep.subr.mxu0 0.0
        %386 = vmatpush2.msra.mxu0 0.0
        %387 = vmatprep.subr.mxu0 0.0
        %388 = vmatpush2.msra.mxu0 0.0
        %389 = vmatprep.subr.mxu0 0.0
        %390 = vmatpush2.msra.mxu0 0.0
        %391 = vmatprep.subr.mxu0 0.0
        %392 = vmatpush2.msra.mxu0 0.0
        %393 = vmatprep.subr.mxu0 0.0
        %394 = vmatpush2.msra.mxu0 0.0
        %395 = vmatprep.subr.mxu0 0.0
        %396 = vmatpush2.msra.mxu0 0.0
        %397 = vmatprep.subr.mxu0 0.0
        %398 = vmatpush2.msra.mxu0 0.0
        %399 = vmatprep.subr.mxu0 0.0
        %400 = vmatpush2.msra.mxu0 0.0
        %401 = vmatprep.subr.mxu0 0.0
        %402 = vmatpush2.msra.mxu0 0.0
        %403 = vmatprep.subr.mxu0 0.0
        %404 = vmatpush2.msra.mxu0 0.0
        %405 = vmatprep.subr.mxu0 0.0
        %406 = vmatpush2.msra.mxu0 0.0
        %407 = vmatprep.subr.mxu0 0.0
        %408 = vmatpush2.msra.mxu0 0.0
        %409 = vmatprep.subr.mxu0 0.0
        %410 = vmatpush2.msra.mxu0 0.0
        %411 = vmatprep.subr.mxu0 0.0
        %412 = vmatpush2.msra.mxu0 0.0
        %413 = vmatprep.subr.mxu0 0.0
        %414 = vmatpush2.msra.mxu0 0.0
        %415 = vmatprep.mubr.f32.mxu0 0.0
        %416 = vmatmul.mubr.f32.gmra.mxu0 %v339
        %v417 = vpop.f32.mrf.mxu0
        %v418 = vadd.f32 0.0, %v417
        %v419 = vpop.f32.mrf.mxu0
        %420 = vmatprep.mubr.f32.mxu0 0.0
        %421 = vmatmul.mubr.f32.gmra.mxu0 %v342
        %v422 = vpop.f32.mrf.mxu0
        %v423 = vadd.f32 0.0, %v422
        %v424 = vpop.f32.mrf.mxu0
        %425 = vmatprep.mubr.f32.mxu0 0.0
        %426 = vmatmul.mubr.f32.gmra.mxu0 %v345
        %v427 = vpop.f32.mrf.mxu0
        %v428 = vadd.f32 0.0, %v427
        %v429 = vpop.f32.mrf.mxu0
        %430 = vdwg.mxu0
        %v431 = vld [vmem:[%s2] sm:$0x1]
        %v433 = vlaneseq
        %v434 = vshrl.u32 %v433, 7
        %v435 = vsub.s32 0, %v434
        %v436 = vrot.slane %v431, %v435
        %v438 = vmul.f32 %v418, %v436
        %v439 = vmul.f32 %v423, %v436
        %v440 = vmul.f32 %v428, %v436
        %v441 = vld [vmem:[%s3] sm:$0x1]
        %v443 = vlaneseq
        %v444 = vshrl.u32 %v443, 7
        %v445 = vsub.s32 0, %v444
        %v446 = vrot.slane %v441, %v445
        %v448 = vadd.f32 %v438, %v446
        %v449 = vadd.f32 %v439, %v446
        %v450 = vadd.f32 %v440, %v446
        %v451 = vmax.f32 %v448, 0.0
        %v452 = vmax.f32 %v449, 0.0
        %v453 = vmax.f32 %v450, 0.0
        %v454 = vlaneseq
        %v455 = vshrl.u32 %v454, 7
        %v456 = vadd.s32 %v455, 8
        %v457 = vadd.s32 %v455, 16
        %vm458 = vcmp.ge.s32.totalorder %v455, 3
        %vm459 = vcmp.ge.s32.totalorder %v456, 3
        %vm460 = vcmp.ge.s32.totalorder %v457, 3
        %vm461 = vcmp.lt.s32.totalorder %v455, 19
        %vm462 = vcmp.lt.s32.totalorder %v456, 19
        %vm463 = vcmp.lt.s32.totalorder %v457, 19
        %vm464 = vmand %vm458, %vm461
        %vm465 = vmand %vm459, %vm462
        %vm466 = vmand %vm460, %vm463
        %v467 = vsel %vm464, %v451, 0.0
        %v468 = vsel %vm465, %v452, 0.0
        %v469 = vsel %vm466, %v453, 0.0
        %v470 = vld [vmem:[%s4] sm:$0xff]
        %v471 = vld [vmem:[%s4 + $0x8] sm:$0xff]
        %v472 = vld [vmem:[%s4 + $0x10] sm:$0xff]
        %v473 = vld [vmem:[%s4 + $0x18] sm:$0xff]
        %v474 = vld [vmem:[%s4 + $0x20] sm:$0xff]
        %v475 = vld [vmem:[%s4 + $0x28] sm:$0xff]
        %v476 = vld [vmem:[%s4 + $0x30] sm:$0xff]
        %v477 = vld [vmem:[%s4 + $0x38] sm:$0xff]
        %v478 = vld [vmem:[%s4 + $0x40] sm:$0xff]
        %v479 = vld [vmem:[%s4 + $0x48] sm:$0xff]
        %v480 = vld [vmem:[%s4 + $0x50] sm:$0xff]
        %v481 = vld [vmem:[%s4 + $0x58] sm:$0xff]
        %s482 = scalar_lea.vmem %s4, 96
        %v483 = vld [vmem:[%s482] sm:$0xff]
        %v484 = vld [vmem:[%s482 + $0x8] sm:$0xff]
        %v485 = vld [vmem:[%s482 + $0x10] sm:$0xff]
        %v486 = vld [vmem:[%s482 + $0x18] sm:$0xff]
        %v487 = vld [vmem:[%s482 + $0x20] sm:$0xff]
        %v488 = vld [vmem:[%s482 + $0x28] sm:$0xff]
        %v489 = vld [vmem:[%s482 + $0x30] sm:$0xff]
        %v490 = vld [vmem:[%s482 + $0x38] sm:$0xff]
        %v491 = vld [vmem:[%s482 + $0x40] sm:$0xff]
        %v492 = vld [vmem:[%s482 + $0x48] sm:$0xff]
        %v493 = vld [vmem:[%s482 + $0x50] sm:$0xff]
        %v494 = vld [vmem:[%s482 + $0x58] sm:$0xff]
        %vm498 = vcmask 1046528
        %v499 = vrot.slane %v467, 1
        %v500 = vrot.slane %v468, 1
        %v501 = vsel %vm498, %v499, %v500
        %v502 = vrot.slane %v469, 1
        %v503 = vsel %vm498, %v500, %v502
        %vm504 = vcmask 785408
        %v505 = vsel %vm504, %v501, 0
        %v507 = vsel %vm504, %v503, 0
        %509 = vmatprep.subr.mxu0 0.0
        %510 = vmatpush1.msra.mxu0 0.0
        %511 = vmatprep.subr.mxu0 0.0
        %512 = vmatpush1.msra.mxu0 0.0
        %513 = vmatprep.subr.mxu0 0.0
        %514 = vmatpush1.msra.mxu0 0.0
        %515 = vmatprep.subr.mxu0 0.0
        %516 = vmatpush1.msra.mxu0 0.0
        %517 = vmatprep.subr.mxu0 0.0
        %518 = vmatpush1.msra.mxu0 %v494
        %519 = vmatprep.subr.mxu0 0.0
        %520 = vmatpush1.msra.mxu0 %v493
        %521 = vmatprep.subr.mxu0 0.0
        %522 = vmatpush1.msra.mxu0 %v492
        %523 = vmatprep.subr.mxu0 0.0
        %524 = vmatpush1.msra.mxu0 %v491
        %525 = vmatprep.subr.mxu0 0.0
        %526 = vmatpush1.msra.mxu0 %v490
        %527 = vmatprep.subr.mxu0 0.0
        %528 = vmatpush1.msra.mxu0 %v489
        %529 = vmatprep.subr.mxu0 0.0
        %530 = vmatpush1.msra.mxu0 %v488
        %531 = vmatprep.subr.mxu0 0.0
        %532 = vmatpush1.msra.mxu0 %v487
        %533 = vmatprep.subr.mxu0 0.0
        %534 = vmatpush1.msra.mxu0 %v486
        %535 = vmatprep.subr.mxu0 0.0
        %536 = vmatpush1.msra.mxu0 %v485
        %537 = vmatprep.subr.mxu0 0.0
        %538 = vmatpush1.msra.mxu0 %v484
        %539 = vmatprep.subr.mxu0 0.0
        %540 = vmatpush1.msra.mxu0 %v483
        %541 = vmatprep.subr.mxu0 0.0
        %542 = vmatpush2.msra.mxu0 0.0
        %543 = vmatprep.subr.mxu0 0.0
        %544 = vmatpush2.msra.mxu0 0.0
        %545 = vmatprep.subr.mxu0 0.0
        %546 = vmatpush2.msra.mxu0 0.0
        %547 = vmatprep.subr.mxu0 0.0
        %548 = vmatpush2.msra.mxu0 0.0
        %549 = vmatprep.subr.mxu0 0.0
        %550 = vmatpush2.msra.mxu0 0.0
        %551 = vmatprep.subr.mxu0 0.0
        %552 = vmatpush2.msra.mxu0 0.0
        %553 = vmatprep.subr.mxu0 0.0
        %554 = vmatpush2.msra.mxu0 0.0
        %555 = vmatprep.subr.mxu0 0.0
        %556 = vmatpush2.msra.mxu0 0.0
        %557 = vmatprep.subr.mxu0 0.0
        %558 = vmatpush2.msra.mxu0 0.0
        %559 = vmatprep.subr.mxu0 0.0
        %560 = vmatpush2.msra.mxu0 0.0
        %561 = vmatprep.subr.mxu0 0.0
        %562 = vmatpush2.msra.mxu0 0.0
        %563 = vmatprep.subr.mxu0 0.0
        %564 = vmatpush2.msra.mxu0 0.0
        %565 = vmatprep.subr.mxu0 0.0
        %566 = vmatpush2.msra.mxu0 0.0
        %567 = vmatprep.subr.mxu0 0.0
        %568 = vmatpush2.msra.mxu0 0.0
        %569 = vmatprep.subr.mxu0 0.0
        %570 = vmatpush2.msra.mxu0 0.0
        %571 = vmatprep.subr.mxu0 0.0
        %572 = vmatpush2.msra.mxu0 0.0
        %573 = vmatprep.mubr.f32.mxu0 0.0
        %574 = vmatmul.mubr.f32.gmra.mxu0 %v505
        %v575 = vpop.f32.mrf.mxu0
        %v576 = vadd.f32 0.0, %v575
        %v577 = vpop.f32.mrf.mxu0
        %578 = vmatprep.mubr.f32.mxu0 0.0
        %579 = vmatmul.mubr.f32.gmra.mxu0 %v507
        %v580 = vpop.f32.mrf.mxu0
        %v581 = vadd.f32 0.0, %v580
        %v582 = vpop.f32.mrf.mxu0
        %583 = vdwg.mxu0
        %v584 = vsel %vm504, %v467, 0
        %v586 = vsel %vm504, %v468, 0
        %588 = vmatprep.subr.mxu0 0.0
        %589 = vmatpush1.msra.mxu0 0.0
        %590 = vmatprep.subr.mxu0 0.0
        %591 = vmatpush1.msra.mxu0 0.0
        %592 = vmatprep.subr.mxu0 0.0
        %593 = vmatpush1.msra.mxu0 0.0
        %594 = vmatprep.subr.mxu0 0.0
        %595 = vmatpush1.msra.mxu0 0.0
        %596 = vmatprep.subr.mxu0 0.0
        %597 = vmatpush1.msra.mxu0 %v481
        %598 = vmatprep.subr.mxu0 0.0
        %599 = vmatpush1.msra.mxu0 %v480
        %600 = vmatprep.subr.mxu0 0.0
        %601 = vmatpush1.msra.mxu0 %v479
        %602 = vmatprep.subr.mxu0 0.0
        %603 = vmatpush1.msra.mxu0 %v478
        %604 = vmatprep.subr.mxu0 0.0
        %605 = vmatpush1.msra.mxu0 %v477
        %606 = vmatprep.subr.mxu0 0.0
        %607 = vmatpush1.msra.mxu0 %v476
        %608 = vmatprep.subr.mxu0 0.0
        %609 = vmatpush1.msra.mxu0 %v475
        %610 = vmatprep.subr.mxu0 0.0
        %611 = vmatpush1.msra.mxu0 %v474
        %612 = vmatprep.subr.mxu0 0.0
        %613 = vmatpush1.msra.mxu0 %v473
        %614 = vmatprep.subr.mxu0 0.0
        %615 = vmatpush1.msra.mxu0 %v472
        %616 = vmatprep.subr.mxu0 0.0
        %617 = vmatpush1.msra.mxu0 %v471
        %618 = vmatprep.subr.mxu0 0.0
        %619 = vmatpush1.msra.mxu0 %v470
        %620 = vmatprep.subr.mxu0 0.0
        %621 = vmatpush2.msra.mxu0 0.0
        %622 = vmatprep.subr.mxu0 0.0
        %623 = vmatpush2.msra.mxu0 0.0
        %624 = vmatprep.subr.mxu0 0.0
        %625 = vmatpush2.msra.mxu0 0.0
        %626 = vmatprep.subr.mxu0 0.0
        %627 = vmatpush2.msra.mxu0 0.0
        %628 = vmatprep.subr.mxu0 0.0
        %629 = vmatpush2.msra.mxu0 0.0
        %630 = vmatprep.subr.mxu0 0.0
        %631 = vmatpush2.msra.mxu0 0.0
        %632 = vmatprep.subr.mxu0 0.0
        %633 = vmatpush2.msra.mxu0 0.0
        %634 = vmatprep.subr.mxu0 0.0
        %635 = vmatpush2.msra.mxu0 0.0
        %636 = vmatprep.subr.mxu0 0.0
        %637 = vmatpush2.msra.mxu0 0.0
        %638 = vmatprep.subr.mxu0 0.0
        %639 = vmatpush2.msra.mxu0 0.0
        %640 = vmatprep.subr.mxu0 0.0
        %641 = vmatpush2.msra.mxu0 0.0
        %642 = vmatprep.subr.mxu0 0.0
        %643 = vmatpush2.msra.mxu0 0.0
        %644 = vmatprep.subr.mxu0 0.0
        %645 = vmatpush2.msra.mxu0 0.0
        %646 = vmatprep.subr.mxu0 0.0
        %647 = vmatpush2.msra.mxu0 0.0
        %648 = vmatprep.subr.mxu0 0.0
        %649 = vmatpush2.msra.mxu0 0.0
        %650 = vmatprep.subr.mxu0 0.0
        %651 = vmatpush2.msra.mxu0 0.0
        %652 = vmatprep.mubr.f32.mxu0 0.0
        %653 = vmatmul.mubr.f32.gmra.mxu0 %v584
        %v654 = vpop.f32.mrf.mxu0
        %v655 = vadd.f32 %v576, %v654
        %v656 = vpop.f32.mrf.mxu0
        %657 = vmatprep.mubr.f32.mxu0 0.0
        %658 = vmatmul.mubr.f32.gmra.mxu0 %v586
        %v659 = vpop.f32.mrf.mxu0
        %v660 = vadd.f32 %v581, %v659
        %v661 = vpop.f32.mrf.mxu0
        %662 = vdwg.mxu0
        %s663 = scalar_lea.vmem %s4, 192
        %v664 = vld [vmem:[%s663] sm:$0xff]
        %v665 = vld [vmem:[%s663 + $0x8] sm:$0xff]
        %v666 = vld [vmem:[%s663 + $0x10] sm:$0xff]
        %v667 = vld [vmem:[%s663 + $0x18] sm:$0xff]
        %v668 = vld [vmem:[%s663 + $0x20] sm:$0xff]
        %v669 = vld [vmem:[%s663 + $0x28] sm:$0xff]
        %v670 = vld [vmem:[%s663 + $0x30] sm:$0xff]
        %v671 = vld [vmem:[%s663 + $0x38] sm:$0xff]
        %v672 = vld [vmem:[%s663 + $0x40] sm:$0xff]
        %v673 = vld [vmem:[%s663 + $0x48] sm:$0xff]
        %v674 = vld [vmem:[%s663 + $0x50] sm:$0xff]
        %v675 = vld [vmem:[%s663 + $0x58] sm:$0xff]
        %vm676 = vcmask 1045504
        %v677 = vrot.slane %v467, 2
        %v678 = vrot.slane %v468, 2
        %v679 = vsel %vm676, %v677, %v678
        %v680 = vrot.slane %v469, 2
        %v681 = vsel %vm676, %v678, %v680
        %v682 = vsel %vm504, %v679, 0
        %v684 = vsel %vm504, %v681, 0
        %686 = vmatprep.subr.mxu0 0.0
        %687 = vmatpush1.msra.mxu0 0.0
        %688 = vmatprep.subr.mxu0 0.0
        %689 = vmatpush1.msra.mxu0 0.0
        %690 = vmatprep.subr.mxu0 0.0
        %691 = vmatpush1.msra.mxu0 0.0
        %692 = vmatprep.subr.mxu0 0.0
        %693 = vmatpush1.msra.mxu0 0.0
        %694 = vmatprep.subr.mxu0 0.0
        %695 = vmatpush1.msra.mxu0 %v675
        %696 = vmatprep.subr.mxu0 0.0
        %697 = vmatpush1.msra.mxu0 %v674
        %698 = vmatprep.subr.mxu0 0.0
        %699 = vmatpush1.msra.mxu0 %v673
        %700 = vmatprep.subr.mxu0 0.0
        %701 = vmatpush1.msra.mxu0 %v672
        %702 = vmatprep.subr.mxu0 0.0
        %703 = vmatpush1.msra.mxu0 %v671
        %704 = vmatprep.subr.mxu0 0.0
        %705 = vmatpush1.msra.mxu0 %v670
        %706 = vmatprep.subr.mxu0 0.0
        %707 = vmatpush1.msra.mxu0 %v669
        %708 = vmatprep.subr.mxu0 0.0
        %709 = vmatpush1.msra.mxu0 %v668
        %710 = vmatprep.subr.mxu0 0.0
        %711 = vmatpush1.msra.mxu0 %v667
        %712 = vmatprep.subr.mxu0 0.0
        %713 = vmatpush1.msra.mxu0 %v666
        %714 = vmatprep.subr.mxu0 0.0
        %715 = vmatpush1.msra.mxu0 %v665
        %716 = vmatprep.subr.mxu0 0.0
        %717 = vmatpush1.msra.mxu0 %v664
        %718 = vmatprep.subr.mxu0 0.0
        %719 = vmatpush2.msra.mxu0 0.0
        %720 = vmatprep.subr.mxu0 0.0
        %721 = vmatpush2.msra.mxu0 0.0
        %722 = vmatprep.subr.mxu0 0.0
        %723 = vmatpush2.msra.mxu0 0.0
        %724 = vmatprep.subr.mxu0 0.0
        %725 = vmatpush2.msra.mxu0 0.0
        %726 = vmatprep.subr.mxu0 0.0
        %727 = vmatpush2.msra.mxu0 0.0
        %728 = vmatprep.subr.mxu0 0.0
        %729 = vmatpush2.msra.mxu0 0.0
        %730 = vmatprep.subr.mxu0 0.0
        %731 = vmatpush2.msra.mxu0 0.0
        %732 = vmatprep.subr.mxu0 0.0
        %733 = vmatpush2.msra.mxu0 0.0
        %734 = vmatprep.subr.mxu0 0.0
        %735 = vmatpush2.msra.mxu0 0.0
        %736 = vmatprep.subr.mxu0 0.0
        %737 = vmatpush2.msra.mxu0 0.0
        %738 = vmatprep.subr.mxu0 0.0
        %739 = vmatpush2.msra.mxu0 0.0
        %740 = vmatprep.subr.mxu0 0.0
        %741 = vmatpush2.msra.mxu0 0.0
        %742 = vmatprep.subr.mxu0 0.0
        %743 = vmatpush2.msra.mxu0 0.0
        %744 = vmatprep.subr.mxu0 0.0
        %745 = vmatpush2.msra.mxu0 0.0
        %746 = vmatprep.subr.mxu0 0.0
        %747 = vmatpush2.msra.mxu0 0.0
        %748 = vmatprep.subr.mxu0 0.0
        %749 = vmatpush2.msra.mxu0 0.0
        %750 = vmatprep.mubr.f32.mxu0 0.0
        %751 = vmatmul.mubr.f32.gmra.mxu0 %v682
        %v752 = vpop.f32.mrf.mxu0
        %v753 = vadd.f32 0.0, %v752
        %v754 = vpop.f32.mrf.mxu0
        %755 = vmatprep.mubr.f32.mxu0 0.0
        %756 = vmatmul.mubr.f32.gmra.mxu0 %v684
        %v757 = vpop.f32.mrf.mxu0
        %v758 = vadd.f32 0.0, %v757
        %v759 = vpop.f32.mrf.mxu0
        %760 = vdwg.mxu0
        %v761 = vadd.f32 %v655, %v753
        %v762 = vadd.f32 %v660, %v758
        %s763 = scalar_lea.vmem %s4, 288
        %v764 = vld [vmem:[%s763] sm:$0xff]
        %v765 = vld [vmem:[%s763 + $0x8] sm:$0xff]
        %v766 = vld [vmem:[%s763 + $0x10] sm:$0xff]
        %v767 = vld [vmem:[%s763 + $0x18] sm:$0xff]
        %v768 = vld [vmem:[%s763 + $0x20] sm:$0xff]
        %v769 = vld [vmem:[%s763 + $0x28] sm:$0xff]
        %v770 = vld [vmem:[%s763 + $0x30] sm:$0xff]
        %v771 = vld [vmem:[%s763 + $0x38] sm:$0xff]
        %v772 = vld [vmem:[%s763 + $0x40] sm:$0xff]
        %v773 = vld [vmem:[%s763 + $0x48] sm:$0xff]
        %v774 = vld [vmem:[%s763 + $0x50] sm:$0xff]
        %v775 = vld [vmem:[%s763 + $0x58] sm:$0xff]
        %vm776 = vcmask 1044480
        %v777 = vrot.slane %v467, 3
        %v778 = vrot.slane %v468, 3
        %v779 = vsel %vm776, %v777, %v778
        %v780 = vrot.slane %v469, 3
        %v781 = vsel %vm776, %v778, %v780
        %v782 = vsel %vm504, %v779, 0
        %v784 = vsel %vm504, %v781, 0
        %786 = vmatprep.subr.mxu0 0.0
        %787 = vmatpush1.msra.mxu0 0.0
        %788 = vmatprep.subr.mxu0 0.0
        %789 = vmatpush1.msra.mxu0 0.0
        %790 = vmatprep.subr.mxu0 0.0
        %791 = vmatpush1.msra.mxu0 0.0
        %792 = vmatprep.subr.mxu0 0.0
        %793 = vmatpush1.msra.mxu0 0.0
        %794 = vmatprep.subr.mxu0 0.0
        %795 = vmatpush1.msra.mxu0 %v775
        %796 = vmatprep.subr.mxu0 0.0
        %797 = vmatpush1.msra.mxu0 %v774
        %798 = vmatprep.subr.mxu0 0.0
        %799 = vmatpush1.msra.mxu0 %v773
        %800 = vmatprep.subr.mxu0 0.0
        %801 = vmatpush1.msra.mxu0 %v772
        %802 = vmatprep.subr.mxu0 0.0
        %803 = vmatpush1.msra.mxu0 %v771
        %804 = vmatprep.subr.mxu0 0.0
        %805 = vmatpush1.msra.mxu0 %v770
        %806 = vmatprep.subr.mxu0 0.0
        %807 = vmatpush1.msra.mxu0 %v769
        %808 = vmatprep.subr.mxu0 0.0
        %809 = vmatpush1.msra.mxu0 %v768
        %810 = vmatprep.subr.mxu0 0.0
        %811 = vmatpush1.msra.mxu0 %v767
        %812 = vmatprep.subr.mxu0 0.0
        %813 = vmatpush1.msra.mxu0 %v766
        %814 = vmatprep.subr.mxu0 0.0
        %815 = vmatpush1.msra.mxu0 %v765
        %816 = vmatprep.subr.mxu0 0.0
        %817 = vmatpush1.msra.mxu0 %v764
        %818 = vmatprep.subr.mxu0 0.0
        %819 = vmatpush2.msra.mxu0 0.0
        %820 = vmatprep.subr.mxu0 0.0
        %821 = vmatpush2.msra.mxu0 0.0
        %822 = vmatprep.subr.mxu0 0.0
        %823 = vmatpush2.msra.mxu0 0.0
        %824 = vmatprep.subr.mxu0 0.0
        %825 = vmatpush2.msra.mxu0 0.0
        %826 = vmatprep.subr.mxu0 0.0
        %827 = vmatpush2.msra.mxu0 0.0
        %828 = vmatprep.subr.mxu0 0.0
        %829 = vmatpush2.msra.mxu0 0.0
        %830 = vmatprep.subr.mxu0 0.0
        %831 = vmatpush2.msra.mxu0 0.0
        %832 = vmatprep.subr.mxu0 0.0
        %833 = vmatpush2.msra.mxu0 0.0
        %834 = vmatprep.subr.mxu0 0.0
        %835 = vmatpush2.msra.mxu0 0.0
        %836 = vmatprep.subr.mxu0 0.0
        %837 = vmatpush2.msra.mxu0 0.0
        %838 = vmatprep.subr.mxu0 0.0
        %839 = vmatpush2.msra.mxu0 0.0
        %840 = vmatprep.subr.mxu0 0.0
        %841 = vmatpush2.msra.mxu0 0.0
        %842 = vmatprep.subr.mxu0 0.0
        %843 = vmatpush2.msra.mxu0 0.0
        %844 = vmatprep.subr.mxu0 0.0
        %845 = vmatpush2.msra.mxu0 0.0
        %846 = vmatprep.subr.mxu0 0.0
        %847 = vmatpush2.msra.mxu0 0.0
        %848 = vmatprep.subr.mxu0 0.0
        %849 = vmatpush2.msra.mxu0 0.0
        %850 = vmatprep.mubr.f32.mxu0 0.0
        %851 = vmatmul.mubr.f32.gmra.mxu0 %v782
        %v852 = vpop.f32.mrf.mxu0
        %v853 = vadd.f32 0.0, %v852
        %v854 = vpop.f32.mrf.mxu0
        %855 = vmatprep.mubr.f32.mxu0 0.0
        %856 = vmatmul.mubr.f32.gmra.mxu0 %v784
        %v857 = vpop.f32.mrf.mxu0
        %v858 = vadd.f32 0.0, %v857
        %v859 = vpop.f32.mrf.mxu0
        %860 = vdwg.mxu0
        %v861 = vadd.f32 %v761, %v853
        %v862 = vadd.f32 %v762, %v858
        %s863 = scalar_lea.vmem %s4, 384
        %v864 = vld [vmem:[%s863] sm:$0xff]
        %v865 = vld [vmem:[%s863 + $0x8] sm:$0xff]
        %v866 = vld [vmem:[%s863 + $0x10] sm:$0xff]
        %v867 = vld [vmem:[%s863 + $0x18] sm:$0xff]
        %v868 = vld [vmem:[%s863 + $0x20] sm:$0xff]
        %v869 = vld [vmem:[%s863 + $0x28] sm:$0xff]
        %v870 = vld [vmem:[%s863 + $0x30] sm:$0xff]
        %v871 = vld [vmem:[%s863 + $0x38] sm:$0xff]
        %v872 = vld [vmem:[%s863 + $0x40] sm:$0xff]
        %v873 = vld [vmem:[%s863 + $0x48] sm:$0xff]
        %v874 = vld [vmem:[%s863 + $0x50] sm:$0xff]
        %v875 = vld [vmem:[%s863 + $0x58] sm:$0xff]
        %v876 = vrot.slane %v467, 4
        %v877 = vrot.slane %v468, 4
        %v878 = vsel %vm347, %v876, %v877
        %v879 = vrot.slane %v469, 4
        %v880 = vsel %vm347, %v877, %v879
        %v881 = vsel %vm504, %v878, 0
        %v883 = vsel %vm504, %v880, 0
        %885 = vmatprep.subr.mxu0 0.0
        %886 = vmatpush1.msra.mxu0 0.0
        %887 = vmatprep.subr.mxu0 0.0
        %888 = vmatpush1.msra.mxu0 0.0
        %889 = vmatprep.subr.mxu0 0.0
        %890 = vmatpush1.msra.mxu0 0.0
        %891 = vmatprep.subr.mxu0 0.0
        %892 = vmatpush1.msra.mxu0 0.0
        %893 = vmatprep.subr.mxu0 0.0
        %894 = vmatpush1.msra.mxu0 %v875
        %895 = vmatprep.subr.mxu0 0.0
        %896 = vmatpush1.msra.mxu0 %v874
        %897 = vmatprep.subr.mxu0 0.0
        %898 = vmatpush1.msra.mxu0 %v873
        %899 = vmatprep.subr.mxu0 0.0
        %900 = vmatpush1.msra.mxu0 %v872
        %901 = vmatprep.subr.mxu0 0.0
        %902 = vmatpush1.msra.mxu0 %v871
        %903 = vmatprep.subr.mxu0 0.0
        %904 = vmatpush1.msra.mxu0 %v870
        %905 = vmatprep.subr.mxu0 0.0
        %906 = vmatpush1.msra.mxu0 %v869
        %907 = vmatprep.subr.mxu0 0.0
        %908 = vmatpush1.msra.mxu0 %v868
        %909 = vmatprep.subr.mxu0 0.0
        %910 = vmatpush1.msra.mxu0 %v867
        %911 = vmatprep.subr.mxu0 0.0
        %912 = vmatpush1.msra.mxu0 %v866
        %913 = vmatprep.subr.mxu0 0.0
        %914 = vmatpush1.msra.mxu0 %v865
        %915 = vmatprep.subr.mxu0 0.0
        %916 = vmatpush1.msra.mxu0 %v864
        %917 = vmatprep.subr.mxu0 0.0
        %918 = vmatpush2.msra.mxu0 0.0
        %919 = vmatprep.subr.mxu0 0.0
        %920 = vmatpush2.msra.mxu0 0.0
        %921 = vmatprep.subr.mxu0 0.0
        %922 = vmatpush2.msra.mxu0 0.0
        %923 = vmatprep.subr.mxu0 0.0
        %924 = vmatpush2.msra.mxu0 0.0
        %925 = vmatprep.subr.mxu0 0.0
        %926 = vmatpush2.msra.mxu0 0.0
        %927 = vmatprep.subr.mxu0 0.0
        %928 = vmatpush2.msra.mxu0 0.0
        %929 = vmatprep.subr.mxu0 0.0
        %930 = vmatpush2.msra.mxu0 0.0
        %931 = vmatprep.subr.mxu0 0.0
        %932 = vmatpush2.msra.mxu0 0.0
        %933 = vmatprep.subr.mxu0 0.0
        %934 = vmatpush2.msra.mxu0 0.0
        %935 = vmatprep.subr.mxu0 0.0
        %936 = vmatpush2.msra.mxu0 0.0
        %937 = vmatprep.subr.mxu0 0.0
        %938 = vmatpush2.msra.mxu0 0.0
        %939 = vmatprep.subr.mxu0 0.0
        %940 = vmatpush2.msra.mxu0 0.0
        %941 = vmatprep.subr.mxu0 0.0
        %942 = vmatpush2.msra.mxu0 0.0
        %943 = vmatprep.subr.mxu0 0.0
        %944 = vmatpush2.msra.mxu0 0.0
        %945 = vmatprep.subr.mxu0 0.0
        %946 = vmatpush2.msra.mxu0 0.0
        %947 = vmatprep.subr.mxu0 0.0
        %948 = vmatpush2.msra.mxu0 0.0
        %949 = vmatprep.mubr.f32.mxu0 0.0
        %950 = vmatmul.mubr.f32.gmra.mxu0 %v881
        %v951 = vpop.f32.mrf.mxu0
        %v952 = vadd.f32 0.0, %v951
        %v953 = vpop.f32.mrf.mxu0
        %954 = vmatprep.mubr.f32.mxu0 0.0
        %955 = vmatmul.mubr.f32.gmra.mxu0 %v883
        %v956 = vpop.f32.mrf.mxu0
        %v957 = vadd.f32 0.0, %v956
        %v958 = vpop.f32.mrf.mxu0
        %959 = vdwg.mxu0
        %v960 = vadd.f32 %v861, %v952
        %v961 = vadd.f32 %v862, %v957
        %s962 = scalar_lea.vmem %s4, 480
        %v963 = vld [vmem:[%s962] sm:$0xff]
        %v964 = vld [vmem:[%s962 + $0x8] sm:$0xff]
        %v965 = vld [vmem:[%s962 + $0x10] sm:$0xff]
        %v966 = vld [vmem:[%s962 + $0x18] sm:$0xff]
        %v967 = vld [vmem:[%s962 + $0x20] sm:$0xff]
        %v968 = vld [vmem:[%s962 + $0x28] sm:$0xff]
        %v969 = vld [vmem:[%s962 + $0x30] sm:$0xff]
        %v970 = vld [vmem:[%s962 + $0x38] sm:$0xff]
        %v971 = vld [vmem:[%s962 + $0x40] sm:$0xff]
        %v972 = vld [vmem:[%s962 + $0x48] sm:$0xff]
        %v973 = vld [vmem:[%s962 + $0x50] sm:$0xff]
        %v974 = vld [vmem:[%s962 + $0x58] sm:$0xff]
        %vm975 = vcmask 1042432
        %v976 = vrot.slane %v467, 5
        %v977 = vrot.slane %v468, 5
        %v978 = vsel %vm975, %v976, %v977
        %v979 = vrot.slane %v469, 5
        %v980 = vsel %vm975, %v977, %v979
        %v981 = vsel %vm504, %v978, 0
        %v983 = vsel %vm504, %v980, 0
        %985 = vmatprep.subr.mxu0 0.0
        %986 = vmatpush1.msra.mxu0 0.0
        %987 = vmatprep.subr.mxu0 0.0
        %988 = vmatpush1.msra.mxu0 0.0
        %989 = vmatprep.subr.mxu0 0.0
        %990 = vmatpush1.msra.mxu0 0.0
        %991 = vmatprep.subr.mxu0 0.0
        %992 = vmatpush1.msra.mxu0 0.0
        %993 = vmatprep.subr.mxu0 0.0
        %994 = vmatpush1.msra.mxu0 %v974
        %995 = vmatprep.subr.mxu0 0.0
        %996 = vmatpush1.msra.mxu0 %v973
        %997 = vmatprep.subr.mxu0 0.0
        %998 = vmatpush1.msra.mxu0 %v972
        %999 = vmatprep.subr.mxu0 0.0
        %1000 = vmatpush1.msra.mxu0 %v971
        %1001 = vmatprep.subr.mxu0 0.0
        %1002 = vmatpush1.msra.mxu0 %v970
        %1003 = vmatprep.subr.mxu0 0.0
        %1004 = vmatpush1.msra.mxu0 %v969
        %1005 = vmatprep.subr.mxu0 0.0
        %1006 = vmatpush1.msra.mxu0 %v968
        %1007 = vmatprep.subr.mxu0 0.0
        %1008 = vmatpush1.msra.mxu0 %v967
        %1009 = vmatprep.subr.mxu0 0.0
        %1010 = vmatpush1.msra.mxu0 %v966
        %1011 = vmatprep.subr.mxu0 0.0
        %1012 = vmatpush1.msra.mxu0 %v965
        %1013 = vmatprep.subr.mxu0 0.0
        %1014 = vmatpush1.msra.mxu0 %v964
        %1015 = vmatprep.subr.mxu0 0.0
        %1016 = vmatpush1.msra.mxu0 %v963
        %1017 = vmatprep.subr.mxu0 0.0
        %1018 = vmatpush2.msra.mxu0 0.0
        %1019 = vmatprep.subr.mxu0 0.0
        %1020 = vmatpush2.msra.mxu0 0.0
        %1021 = vmatprep.subr.mxu0 0.0
        %1022 = vmatpush2.msra.mxu0 0.0
        %1023 = vmatprep.subr.mxu0 0.0
        %1024 = vmatpush2.msra.mxu0 0.0
        %1025 = vmatprep.subr.mxu0 0.0
        %1026 = vmatpush2.msra.mxu0 0.0
        %1027 = vmatprep.subr.mxu0 0.0
        %1028 = vmatpush2.msra.mxu0 0.0
        %1029 = vmatprep.subr.mxu0 0.0
        %1030 = vmatpush2.msra.mxu0 0.0
        %1031 = vmatprep.subr.mxu0 0.0
        %1032 = vmatpush2.msra.mxu0 0.0
        %1033 = vmatprep.subr.mxu0 0.0
        %1034 = vmatpush2.msra.mxu0 0.0
        %1035 = vmatprep.subr.mxu0 0.0
        %1036 = vmatpush2.msra.mxu0 0.0
        %1037 = vmatprep.subr.mxu0 0.0
        %1038 = vmatpush2.msra.mxu0 0.0
        %1039 = vmatprep.subr.mxu0 0.0
        %1040 = vmatpush2.msra.mxu0 0.0
        %1041 = vmatprep.subr.mxu0 0.0
        %1042 = vmatpush2.msra.mxu0 0.0
        %1043 = vmatprep.subr.mxu0 0.0
        %1044 = vmatpush2.msra.mxu0 0.0
        %1045 = vmatprep.subr.mxu0 0.0
        %1046 = vmatpush2.msra.mxu0 0.0
        %1047 = vmatprep.subr.mxu0 0.0
        %1048 = vmatpush2.msra.mxu0 0.0
        %1049 = vmatprep.mubr.f32.mxu0 0.0
        %1050 = vmatmul.mubr.f32.gmra.mxu0 %v981
        %v1051 = vpop.f32.mrf.mxu0
        %v1052 = vadd.f32 0.0, %v1051
        %v1053 = vpop.f32.mrf.mxu0
        %1054 = vmatprep.mubr.f32.mxu0 0.0
        %1055 = vmatmul.mubr.f32.gmra.mxu0 %v983
        %v1056 = vpop.f32.mrf.mxu0
        %v1057 = vadd.f32 0.0, %v1056
        %v1058 = vpop.f32.mrf.mxu0
        %1059 = vdwg.mxu0
        %v1060 = vadd.f32 %v960, %v1052
        %v1061 = vadd.f32 %v961, %v1057
        %s1062 = scalar_lea.vmem %s4, 576
        %v1063 = vld [vmem:[%s1062] sm:$0xff]
        %v1064 = vld [vmem:[%s1062 + $0x8] sm:$0xff]
        %v1065 = vld [vmem:[%s1062 + $0x10] sm:$0xff]
        %v1066 = vld [vmem:[%s1062 + $0x18] sm:$0xff]
        %v1067 = vld [vmem:[%s1062 + $0x20] sm:$0xff]
        %v1068 = vld [vmem:[%s1062 + $0x28] sm:$0xff]
        %v1069 = vld [vmem:[%s1062 + $0x30] sm:$0xff]
        %v1070 = vld [vmem:[%s1062 + $0x38] sm:$0xff]
        %v1071 = vld [vmem:[%s1062 + $0x40] sm:$0xff]
        %v1072 = vld [vmem:[%s1062 + $0x48] sm:$0xff]
        %v1073 = vld [vmem:[%s1062 + $0x50] sm:$0xff]
        %v1074 = vld [vmem:[%s1062 + $0x58] sm:$0xff]
        %vm1075 = vcmask 1041408
        %v1076 = vrot.slane %v467, 6
        %v1077 = vrot.slane %v468, 6
        %v1078 = vsel %vm1075, %v1076, %v1077
        %v1079 = vrot.slane %v469, 6
        %v1080 = vsel %vm1075, %v1077, %v1079
        %v1081 = vsel %vm504, %v1078, 0
        %v1083 = vsel %vm504, %v1080, 0
        %1085 = vmatprep.subr.mxu0 0.0
        %1086 = vmatpush1.msra.mxu0 0.0
        %1087 = vmatprep.subr.mxu0 0.0
        %1088 = vmatpush1.msra.mxu0 0.0
        %1089 = vmatprep.subr.mxu0 0.0
        %1090 = vmatpush1.msra.mxu0 0.0
        %1091 = vmatprep.subr.mxu0 0.0
        %1092 = vmatpush1.msra.mxu0 0.0
        %1093 = vmatprep.subr.mxu0 0.0
        %1094 = vmatpush1.msra.mxu0 %v1074
        %1095 = vmatprep.subr.mxu0 0.0
        %1096 = vmatpush1.msra.mxu0 %v1073
        %1097 = vmatprep.subr.mxu0 0.0
        %1098 = vmatpush1.msra.mxu0 %v1072
        %1099 = vmatprep.subr.mxu0 0.0
        %1100 = vmatpush1.msra.mxu0 %v1071
        %1101 = vmatprep.subr.mxu0 0.0
        %1102 = vmatpush1.msra.mxu0 %v1070
        %1103 = vmatprep.subr.mxu0 0.0
        %1104 = vmatpush1.msra.mxu0 %v1069
        %1105 = vmatprep.subr.mxu0 0.0
        %1106 = vmatpush1.msra.mxu0 %v1068
        %1107 = vmatprep.subr.mxu0 0.0
        %1108 = vmatpush1.msra.mxu0 %v1067
        %1109 = vmatprep.subr.mxu0 0.0
        %1110 = vmatpush1.msra.mxu0 %v1066
        %1111 = vmatprep.subr.mxu0 0.0
        %1112 = vmatpush1.msra.mxu0 %v1065
        %1113 = vmatprep.subr.mxu0 0.0
        %1114 = vmatpush1.msra.mxu0 %v1064
        %1115 = vmatprep.subr.mxu0 0.0
        %1116 = vmatpush1.msra.mxu0 %v1063
        %1117 = vmatprep.subr.mxu0 0.0
        %1118 = vmatpush2.msra.mxu0 0.0
        %1119 = vmatprep.subr.mxu0 0.0
        %1120 = vmatpush2.msra.mxu0 0.0
        %1121 = vmatprep.subr.mxu0 0.0
        %1122 = vmatpush2.msra.mxu0 0.0
        %1123 = vmatprep.subr.mxu0 0.0
        %1124 = vmatpush2.msra.mxu0 0.0
        %1125 = vmatprep.subr.mxu0 0.0
        %1126 = vmatpush2.msra.mxu0 0.0
        %1127 = vmatprep.subr.mxu0 0.0
        %1128 = vmatpush2.msra.mxu0 0.0
        %1129 = vmatprep.subr.mxu0 0.0
        %1130 = vmatpush2.msra.mxu0 0.0
        %1131 = vmatprep.subr.mxu0 0.0
        %1132 = vmatpush2.msra.mxu0 0.0
        %1133 = vmatprep.subr.mxu0 0.0
        %1134 = vmatpush2.msra.mxu0 0.0
        %1135 = vmatprep.subr.mxu0 0.0
        %1136 = vmatpush2.msra.mxu0 0.0
        %1137 = vmatprep.subr.mxu0 0.0
        %1138 = vmatpush2.msra.mxu0 0.0
        %1139 = vmatprep.subr.mxu0 0.0
        %1140 = vmatpush2.msra.mxu0 0.0
        %1141 = vmatprep.subr.mxu0 0.0
        %1142 = vmatpush2.msra.mxu0 0.0
        %1143 = vmatprep.subr.mxu0 0.0
        %1144 = vmatpush2.msra.mxu0 0.0
        %1145 = vmatprep.subr.mxu0 0.0
        %1146 = vmatpush2.msra.mxu0 0.0
        %1147 = vmatprep.subr.mxu0 0.0
        %1148 = vmatpush2.msra.mxu0 0.0
        %1149 = vmatprep.mubr.f32.mxu0 0.0
        %1150 = vmatmul.mubr.f32.gmra.mxu0 %v1081
        %v1151 = vpop.f32.mrf.mxu0
        %v1152 = vadd.f32 0.0, %v1151
        %v1153 = vpop.f32.mrf.mxu0
        %1154 = vmatprep.mubr.f32.mxu0 0.0
        %1155 = vmatmul.mubr.f32.gmra.mxu0 %v1083
        %v1156 = vpop.f32.mrf.mxu0
        %v1157 = vadd.f32 0.0, %v1156
        %v1158 = vpop.f32.mrf.mxu0
        %1159 = vdwg.mxu0
        %v1160 = vadd.f32 %v1060, %v1152
        %v1161 = vadd.f32 %v1061, %v1157
        %v1162 = vld [vmem:[%s5] sm:$0x1]
        %v1164 = vlaneseq
        %v1165 = vshrl.u32 %v1164, 7
        %v1166 = vsub.s32 0, %v1165
        %v1167 = vrot.slane %v1162, %v1166
        %v1169 = vmul.f32 %v1160, %v1167
        %v1170 = vmul.f32 %v1161, %v1167
        %v1171 = vld [vmem:[%s6] sm:$0x1]
        %v1173 = vlaneseq
        %v1174 = vshrl.u32 %v1173, 7
        %v1175 = vsub.s32 0, %v1174
        %v1176 = vrot.slane %v1171, %v1175
        %v1178 = vadd.f32 %v1169, %v1176
        %v1179 = vadd.f32 %v1170, %v1176
        %v1180 = vmax.f32 %v1178, 0.0
        %v1181 = vmax.f32 %v1179, 0.0
        %v1182 = vsel %vm504, %v1180, -inf
        %v1183 = vsel %vm504, %v1181, -inf
        %v1184 = vmax.f32 %v1182, %v1183
        %v1185 = vrot.slane %v1184, 4
        %v1186 = vmax.f32 %v1184, %v1185
        %v1187 = vrot.slane %v1186, 2
        %v1188 = vmax.f32 %v1186, %v1187
        %v1189 = vrot.slane %v1188, 1
        %v1190 = vmax.f32 %v1188, %v1189
        %v1191 = vld [vmem:[%s7] sm:$0xff]
        %v1192 = vld [vmem:[%s7 + $0x8] sm:$0xff]
        %v1193 = vld [vmem:[%s7 + $0x10] sm:$0xff]
        %v1194 = vld [vmem:[%s7 + $0x18] sm:$0xff]
        %v1195 = vld [vmem:[%s7 + $0x20] sm:$0xff]
        %v1196 = vld [vmem:[%s7 + $0x28] sm:$0xff]
        %v1197 = vld [vmem:[%s7 + $0x30] sm:$0xff]
        %v1198 = vld [vmem:[%s7 + $0x38] sm:$0xff]
        %v1199 = vld [vmem:[%s7 + $0x40] sm:$0xff]
        %v1200 = vld [vmem:[%s7 + $0x48] sm:$0xff]
        %v1201 = vld [vmem:[%s7 + $0x50] sm:$0xff]
        %v1202 = vld [vmem:[%s7 + $0x58] sm:$0xff]
        %v1203 = vld [vmem:[%s8] sm:$0x1]
        %v1205 = vsel %vm504, %v1190, 0
        %1207 = vmatprep.subr.mxu0 0.0
        %1208 = vmatpush1.msra.mxu0 0.0
        %1209 = vmatprep.subr.mxu0 0.0
        %1210 = vmatpush1.msra.mxu0 0.0
        %1211 = vmatprep.subr.mxu0 0.0
        %1212 = vmatpush1.msra.mxu0 0.0
        %1213 = vmatprep.subr.mxu0 0.0
        %1214 = vmatpush1.msra.mxu0 0.0
        %1215 = vmatprep.subr.mxu0 0.0
        %1216 = vmatpush1.msra.mxu0 %v1202
        %1217 = vmatprep.subr.mxu0 0.0
        %1218 = vmatpush1.msra.mxu0 %v1201
        %1219 = vmatprep.subr.mxu0 0.0
        %1220 = vmatpush1.msra.mxu0 %v1200
        %1221 = vmatprep.subr.mxu0 0.0
        %1222 = vmatpush1.msra.mxu0 %v1199
        %1223 = vmatprep.subr.mxu0 0.0
        %1224 = vmatpush1.msra.mxu0 %v1198
        %1225 = vmatprep.subr.mxu0 0.0
        %1226 = vmatpush1.msra.mxu0 %v1197
        %1227 = vmatprep.subr.mxu0 0.0
        %1228 = vmatpush1.msra.mxu0 %v1196
        %1229 = vmatprep.subr.mxu0 0.0
        %1230 = vmatpush1.msra.mxu0 %v1195
        %1231 = vmatprep.subr.mxu0 0.0
        %1232 = vmatpush1.msra.mxu0 %v1194
        %1233 = vmatprep.subr.mxu0 0.0
        %1234 = vmatpush1.msra.mxu0 %v1193
        %1235 = vmatprep.subr.mxu0 0.0
        %1236 = vmatpush1.msra.mxu0 %v1192
        %1237 = vmatprep.subr.mxu0 0.0
        %1238 = vmatpush1.msra.mxu0 %v1191
        %1239 = vmatprep.subr.mxu0 0.0
        %1240 = vmatpush2.msra.mxu0 0.0
        %1241 = vmatprep.subr.mxu0 0.0
        %1242 = vmatpush2.msra.mxu0 0.0
        %1243 = vmatprep.subr.mxu0 0.0
        %1244 = vmatpush2.msra.mxu0 0.0
        %1245 = vmatprep.subr.mxu0 0.0
        %1246 = vmatpush2.msra.mxu0 0.0
        %1247 = vmatprep.subr.mxu0 0.0
        %1248 = vmatpush2.msra.mxu0 0.0
        %1249 = vmatprep.subr.mxu0 0.0
        %1250 = vmatpush2.msra.mxu0 0.0
        %1251 = vmatprep.subr.mxu0 0.0
        %1252 = vmatpush2.msra.mxu0 0.0
        %1253 = vmatprep.subr.mxu0 0.0
        %1254 = vmatpush2.msra.mxu0 0.0
        %1255 = vmatprep.subr.mxu0 0.0
        %1256 = vmatpush2.msra.mxu0 0.0
        %1257 = vmatprep.subr.mxu0 0.0
        %1258 = vmatpush2.msra.mxu0 0.0
        %1259 = vmatprep.subr.mxu0 0.0
        %1260 = vmatpush2.msra.mxu0 0.0
        %1261 = vmatprep.subr.mxu0 0.0
        %1262 = vmatpush2.msra.mxu0 0.0
        %1263 = vmatprep.subr.mxu0 0.0
        %1264 = vmatpush2.msra.mxu0 0.0
        %1265 = vmatprep.subr.mxu0 0.0
        %1266 = vmatpush2.msra.mxu0 0.0
        %1267 = vmatprep.subr.mxu0 0.0
        %1268 = vmatpush2.msra.mxu0 0.0
        %1269 = vmatprep.subr.mxu0 0.0
        %1270 = vmatpush2.msra.mxu0 0.0
        %1271 = vmatprep.mubr.f32.mxu0 0.0
        %1272 = vmatmul.mubr.f32.gmra.mxu0 %v1205
        %v1273 = vpop.f32.mrf.mxu0
        %v1274 = vadd.f32 %v1203, %v1273
        %v1275 = vpop.f32.mrf.mxu0
        %1276 = vdwg.mxu0
        %vm1277 = vcmask 24576
        %1278 = vst.msk [vmem:[%s324] sm:$0x1] %vm1277, %v1274
        %s1279 = sand.u32 %s225, 1
        %s1280 = scalar_lea.sflag [#allocation3], %s1279
        %s1281 = sand.u32 %s225, 1
        %s1282 = scalar_lea.vmem [#allocation2], %s1281
        // Predicated region
        $region57: #{multiscale_cnn_forward.1} parent=55 // pred_check
          %p1283 = pneg %p235
        $region58: #{multiscale_cnn_forward.1} parent=55 // pred_check_branch
          %1285 = sbr.rel (%p1283) target = $region60
        $region59: #{multiscale_cnn_forward.1} parent=55 // pred_region
          %s1287 = ssub.s32 16, 16
          %1288 = vsyncadd %s1280, %s1287
          %s1289 = smul.addr %s23, 16
          %s1290 = scalar_lea.hbm %s9, %s1289
          %s1292 = sshll.u32 %s1282, 4
          %s1293 = int_to_ptr.vmem [resolvable:$true] %s1292
          %1295 = dma.vmem_to_hbm [thread:$0]  %s1293, 16, %s1290, %s1280
        $region60: #{multiscale_cnn_forward.1} parent=55 // pred_fallthru
          _
      $region56: #{multiscale_cnn_forward.1} parent=5 // pred_fallthru
        _
      %p1296 = scmp.le.s32.totalorder 2, %s18
      // Predicated region
      $region61: #{multiscale_cnn_forward.1} parent=5 // pred_check
        %p1297 = pneg %p1296
      $region62: #{multiscale_cnn_forward.1} parent=5 // pred_check_branch
        %1299 = sbr.rel (%p1297) target = $region64
      $region63: #{multiscale_cnn_forward.1} parent=5 // pred_region
        %s1300 = ssub.s32 %s18, 2
        // Predicated region
        $region65: #{multiscale_cnn_forward.1} parent=63 // pred_check
          %p1301 = pneg %p241
        $region66: #{multiscale_cnn_forward.1} parent=63 // pred_check_branch
          %1303 = sbr.rel (%p1301) target = $region68
        $region67: #{multiscale_cnn_forward.1} parent=63 // pred_region
          %s1304 = sand.u32 %s226, 1
          %s1305 = scalar_lea.sflag [#allocation3], %s1304
          %s1306 = sand.u32 %s226, 1
          %s1307 = scalar_lea.vmem [#allocation2], %s1306
          %1308 = dma.done %s1305, 16
        $region68: #{multiscale_cnn_forward.1} parent=63 // pred_fallthru
          _
      $region64: #{multiscale_cnn_forward.1} parent=5 // pred_fallthru
        _
    $region6: #{multiscale_cnn_forward.1} parent=1 // loop_footer
      %s22 = sadd.s32 1, %s18
    $region7: #{multiscale_cnn_forward.1} parent=1 // loop_footer_branch
      %17 = sbr.rel target = $region3
    $region8: #{multiscale_cnn_forward.1} parent=1 // loop_exit
      _
    %1309 = vsyncpa [#allocation3], 1
    %s1310 = scalar_lea.sflag [#allocation3], 1
    %1311 = vsyncpa %s1310, 1

</llo_original>
